<compile_context>
chip_gen: v7x
topology: tpu7x:2x2x1
jax: 0.10.0
libtpu: 0.0.40
codegen_flags: <defaults>
</compile_context>

<pallas_src>
import jax
import jax.numpy as jnp
from jax.experimental import pallas as pl
from jax.experimental.pallas import tpu as pltpu

# ---- model dims (from the PyTorch module) -----------------------------------
GLOBAL_IN, GLOBAL_OUT = 30, 64
AGENT_IN, AGENT_OUT = 73, 128
N_AGENTS = 6
FEAT_IN = GLOBAL_IN + N_AGENTS * AGENT_IN            # 468
SHARE_IN = GLOBAL_OUT + N_AGENTS * AGENT_OUT         # 832
SHARE_H1, SHARE_H2 = 256, 128
N_ACTIONS = 52
OBS_DIM = FEAT_IN + N_ACTIONS                        # 520

LANE = 128
N_SLOTS = 1 + N_AGENTS + 1                           # global + 6 agents + mask
PACK_W = N_SLOTS * LANE                              # 1024-wide bf16 input slab
MASK_OFF = (1 + N_AGENTS) * LANE                     # 896
H1_PACK = (1 + N_AGENTS) * LANE                      # 896 lane-aligned h1 width
HEAD_PAD = 64                                        # fused action+value head width
MASK_FILL = float(jnp.finfo(jnp.float32).min)        # matches torch.finfo(f32).min


# ------------------------------------------------------------------ kernel ---
def _mlp_kernel(x_ref,                    # [TB, 1024] bf16 packed slab
                wg_ref, bg_ref,           # global layer:  [128,128] bf16, [1,128] f32
                wag_ref, bag_ref,         # agent layers:  [6,128,128] bf16, [6,128] f32
                w2_ref, b2_ref,           # share layer 1: [896,256] bf16,  [1,256] f32
                w3_ref, b3_ref,           # share layer 2: [256,128] bf16,  [1,128] f32
                wh_ref, bh_ref,           # fused head:    [128,64] bf16,   [1,64]  f32
                out_ref,                  # [TB, 64] slab (logits 0:52, value @ 52)
                h1_ref):                  # VMEM scratch [TB, 896] bf16
    f32 = jnp.float32
    bf16 = jnp.bfloat16

    # ---- stage 1: per-entity Linear+ReLU into the lane-aligned h1 scratch ----
    hg = jnp.maximum(
        jnp.dot(x_ref[:, 0:LANE], wg_ref[...], preferred_element_type=f32)
        + bg_ref[...], 0.0)                                        # [TB,128] (cols 64: = 0)
    h1_ref[:, 0:LANE] = hg.astype(bf16)
    for i in range(N_AGENTS):                                      # unrolled at trace time
        lo = LANE * (1 + i)
        hi = jnp.maximum(
            jnp.dot(x_ref[:, lo:lo + LANE], wag_ref[i], preferred_element_type=f32)
            + bag_ref[i:i + 1, :], 0.0)                            # [TB,128]
        h1_ref[:, lo:lo + LANE] = hi.astype(bf16)

    # ---- share layer 1: single K=896 matmul (w2 row-packed to the h1 layout) -
    h2 = jnp.maximum(
        jnp.dot(h1_ref[...], w2_ref[...], preferred_element_type=f32)
        + b2_ref[...], 0.0)                                        # [TB,256]

    # ---- share layer 2 --------------------------------------------------------
    h3 = jnp.maximum(
        jnp.dot(h2.astype(bf16), w3_ref[...], preferred_element_type=f32)
        + b3_ref[...], 0.0)                                        # [TB,128]

    # ---- fused action + value head -> single lane-dense output slab -----------
    out = (jnp.dot(h3.astype(bf16), wh_ref[...], preferred_element_type=f32)
           + bh_ref[...])                                          # [TB,64]

    # ---- action masking: logits*m + (1-m)*finfo(f32).min ----------------------
    # mask slot pad columns were pre-filled with 1.0 -> value/pad cols pass thru.
    keep = x_ref[:, MASK_OFF:MASK_OFF + HEAD_PAD].astype(f32)      # [TB,64]
    out_ref[...] = out * keep + (1.0 - keep) * MASK_FILL


# ---------------------------------------------------------------- wrappers ---
def pack_states(states):
    """[B,520] -> lane-aligned bf16 [B,1024] slab.

    Slot layout (128 lanes each): 0 global(30), 1..6 agents(73), 7 mask(52).
    Feature pad columns are 0.0; mask pad columns are 1.0.
    # TODO(synk): in a real RL pipeline produce this slab upstream so the
    # extra repack pass disappears and the kernel reads bf16 directly.
    """
    s = states.astype(jnp.bfloat16)

    def pad(a, fill=0.0):
        return jnp.pad(a, ((0, 0), (0, LANE - a.shape[1])), constant_values=fill)

    chunks = [pad(s[:, :GLOBAL_IN])]
    for i in range(N_AGENTS):
        lo = GLOBAL_IN + i * AGENT_IN
        chunks.append(pad(s[:, lo:lo + AGENT_IN]))
    chunks.append(pad(s[:, FEAT_IN:FEAT_IN + N_ACTIONS], fill=1.0))
    return jnp.concatenate(chunks, axis=1)                         # [B,1024] bf16


def _pick_tb(B):
    if B <= 256:
        return B                       # single grid step; tiny / demo batches
    # >=2 grid steps so both v7x TensorCores get work; <=1024-row tiles keep the
    # per-step VMEM footprint (~2 MB bf16 states, double-buffered) safe on all
    # generations.  TODO(synk): on v6e with huge B the cap could go to 2048-4096.
    tb = min(1024, pl.cdiv(B, 2))
    return ((tb + 7) // 8) * 8


def model_forward(states, params):
    """states: [B, 520] float32.  Returns (masked_logits [B,52], value [B])."""
    B = states.shape[0]
    x = pack_states(states)
    TB = _pick_tb(B)
    grid = (pl.cdiv(B, TB),)

    def const_spec(p):
        nd = p.ndim
        return pl.BlockSpec(p.shape, lambda i, _nd=nd: (0,) * _nd)

    in_specs = [pl.BlockSpec((TB, PACK_W), lambda i: (i, 0))]
    in_specs += [const_spec(p) for p in params]
    out_specs = pl.BlockSpec((TB, HEAD_PAD), lambda i: (i, 0))

    out = pl.pallas_call(
        _mlp_kernel,
        out_shape=jax.ShapeDtypeStruct((B, HEAD_PAD), jnp.float32),
        grid_spec=pltpu.PrefetchScalarGridSpec(
            num_scalar_prefetch=0,
            grid=grid,
            in_specs=in_specs,
            out_specs=out_specs,
            scratch_shapes=[pltpu.VMEM((TB, H1_PACK), jnp.bfloat16)]),
        compiler_params=pltpu.CompilerParams(
            dimension_semantics=("parallel",)),
    )(x, *params)
    return out[:, :N_ACTIONS], out[:, N_ACTIONS]


# ------------------------------------------------------------------ params ---
def init_params(key):
    """Deterministic init; returns the flat tuple fed to the kernel."""
    ks = jax.random.split(key, 11)

    def lin(k, fan_in, fan_out):
        kw, kb = jax.random.split(k)
        bound = 1.0 / jnp.sqrt(fan_in)
        w = jax.random.uniform(kw, (fan_in, fan_out), jnp.float32, -bound, bound)
        b = jax.random.uniform(kb, (1, fan_out), jnp.float32, -bound, bound)
        return w, b

    bf16 = jnp.bfloat16

    # global state layer (30 -> 64), zero-padded to [128,128] (K and N)
    wg_, bg_ = lin(ks[0], GLOBAL_IN, GLOBAL_OUT)
    wg = jnp.zeros((LANE, LANE), jnp.float32).at[:GLOBAL_IN, :GLOBAL_OUT].set(wg_)
    bg = jnp.zeros((1, LANE), jnp.float32).at[:, :GLOBAL_OUT].set(bg_)

    # 6 agent state layers (73 -> 128), zero-padded to K=128
    aw, ab = [], []
    for i in range(N_AGENTS):
        w, b = lin(ks[1 + i], AGENT_IN, AGENT_OUT)
        aw.append(jnp.zeros((LANE, AGENT_OUT), jnp.float32).at[:AGENT_IN].set(w))
        ab.append(b)
    wag = jnp.stack(aw, axis=0)                 # [6,128,128]
    bag = jnp.concatenate(ab, axis=0)           # [6,128]

    # share layer 1 (832 -> 256), rows repacked to match the lane-aligned h1 slab
    w2_, b2 = lin(ks[7], SHARE_IN, SHARE_H1)
    w2 = jnp.zeros((H1_PACK, SHARE_H1), jnp.float32)
    w2 = w2.at[:GLOBAL_OUT].set(w2_[:GLOBAL_OUT])            # rows 64:128 stay 0
    for i in range(N_AGENTS):
        src = GLOBAL_OUT + i * AGENT_OUT
        dst = LANE * (1 + i)
        w2 = w2.at[dst:dst + AGENT_OUT].set(w2_[src:src + AGENT_OUT])

    w3, b3 = lin(ks[8], SHARE_H1, SHARE_H2)

    # fused action (128->52) + value (128->1) head, padded to 64 lanes
    wa, ba = lin(ks[9], SHARE_H2, N_ACTIONS)
    wv, bv = lin(ks[10], SHARE_H2, 1)
    wh = jnp.zeros((SHARE_H2, HEAD_PAD), jnp.float32)
    wh = wh.at[:, :N_ACTIONS].set(wa).at[:, N_ACTIONS:N_ACTIONS + 1].set(wv)
    bh = jnp.zeros((1, HEAD_PAD), jnp.float32)
    bh = bh.at[:, :N_ACTIONS].set(ba).at[:, N_ACTIONS:N_ACTIONS + 1].set(bv)

    return (wg.astype(bf16), bg,
            wag.astype(bf16), bag,
            w2.astype(bf16), b2,
            w3.astype(bf16), b3,
            wh.astype(bf16), bh)


# --------------------------------------------------------------- reference ---
def reference_forward(states, params):
    """Plain-JAX reference of the same (bf16-weight, f32-accum) math."""
    wg, bg, wag, bag, w2, b2, w3, b3, wh, bh = params
    f32, bf16 = jnp.float32, jnp.bfloat16
    x = pack_states(states)

    def relu(a):
        return jnp.maximum(a, 0.0)

    hg = relu(jnp.dot(x[:, :LANE], wg, preferred_element_type=f32) + bg)
    chunks = [hg.astype(bf16)]
    for i in range(N_AGENTS):
        lo = LANE * (1 + i)
        hi = relu(jnp.dot(x[:, lo:lo + LANE], wag[i], preferred_element_type=f32)
                  + bag[i:i + 1, :])
        chunks.append(hi.astype(bf16))
    h1 = jnp.concatenate(chunks, axis=1)
    h2 = relu(jnp.dot(h1, w2, preferred_element_type=f32) + b2)
    h3 = relu(jnp.dot(h2.astype(bf16), w3, preferred_element_type=f32) + b3)
    out = jnp.dot(h3.astype(bf16), wh, preferred_element_type=f32) + bh
    mask = states[:, FEAT_IN:FEAT_IN + N_ACTIONS]
    logits = out[:, :N_ACTIONS] * mask + (1.0 - mask) * MASK_FILL
    value = out[:, N_ACTIONS]
    return logits, value


# ------------------------------------------------------------------- main ----
if __name__ == "__main__":
    key = jax.random.PRNGKey(0)
    k_params, k_obs, k_mask = jax.random.split(key, 3)

    B = 8
    params = init_params(k_params)

    obs_feat = jax.random.normal(k_obs, (B, FEAT_IN), jnp.float32)
    action_mask = (jax.random.uniform(k_mask, (B, N_ACTIONS)) > 0.5).astype(jnp.float32)
    states = jnp.concatenate([obs_feat, action_mask], axis=1)   # [B, 520]

    fwd = jax.jit(model_forward)
    logits, value = jax.block_until_ready(fwd(states, params))
    ref_logits, ref_value = reference_forward(states, params)

    assert logits.shape == (B, N_ACTIONS) and value.shape == (B,)
    assert jnp.allclose(logits, ref_logits, rtol=1e-2, atol=1e-2)
    assert jnp.allclose(value, ref_value, rtol=1e-2, atol=1e-2)
    print("KERNEL_OK")
</pallas_src>

<mosaic_0001>
module attributes {stable_mosaic.version = 11 : i64} {
  func.func @_mlp_kernel(%arg0: i32, %arg1: memref<8x1024xbf16, #tpu.memory_space<vmem>>, %arg2: memref<128x128xbf16, #tpu.memory_space<vmem>>, %arg3: memref<1x128xf32, #tpu.memory_space<vmem>>, %arg4: memref<6x128x128xbf16, #tpu.memory_space<vmem>>, %arg5: memref<6x128xf32, #tpu.memory_space<vmem>>, %arg6: memref<896x256xbf16, #tpu.memory_space<vmem>>, %arg7: memref<1x256xf32, #tpu.memory_space<vmem>>, %arg8: memref<256x128xbf16, #tpu.memory_space<vmem>>, %arg9: memref<1x128xf32, #tpu.memory_space<vmem>>, %arg10: memref<128x64xbf16, #tpu.memory_space<vmem>>, %arg11: memref<1x64xf32, #tpu.memory_space<vmem>>, %arg12: memref<8x64xf32, #tpu.memory_space<vmem>>, %arg13: memref<8x896xbf16, #tpu.memory_space<vmem>>) attributes {dimension_semantics = [#tpu.dimension_semantics<parallel>], iteration_bounds = array<i64: 1>, scalar_prefetch = 0 : i64, scratch_operands = 1 : i64, tpu.core_type = #tpu.core_type<tc>, window_params = [{transform_indices = @transform_0, window_bounds = array<i64: 8, 1024>}, {pipeline_mode = #tpu.pipeline_mode<synchronous>, transform_indices = @transform_1, window_bounds = array<i64: 128, 128>}, {pipeline_mode = #tpu.pipeline_mode<synchronous>, transform_indices = @transform_2, window_bounds = array<i64: 1, 128>}, {pipeline_mode = #tpu.pipeline_mode<synchronous>, transform_indices = @transform_3, window_bounds = array<i64: 6, 128, 128>}, {pipeline_mode = #tpu.pipeline_mode<synchronous>, transform_indices = @transform_4, window_bounds = array<i64: 6, 128>}, {pipeline_mode = #tpu.pipeline_mode<synchronous>, transform_indices = @transform_5, window_bounds = array<i64: 896, 256>}, {pipeline_mode = #tpu.pipeline_mode<synchronous>, transform_indices = @transform_6, window_bounds = array<i64: 1, 256>}, {pipeline_mode = #tpu.pipeline_mode<synchronous>, transform_indices = @transform_7, window_bounds = array<i64: 256, 128>}, {pipeline_mode = #tpu.pipeline_mode<synchronous>, transform_indices = @transform_8, window_bounds = array<i64: 1, 128>}, {pipeline_mode = #tpu.pipeline_mode<synchronous>, transform_indices = @transform_9, window_bounds = array<i64: 128, 64>}, {pipeline_mode = #tpu.pipeline_mode<synchronous>, transform_indices = @transform_10, window_bounds = array<i64: 1, 64>}, {transform_indices = @transform_11, window_bounds = array<i64: 8, 64>}]} {
    %c0 = arith.constant 0 : index
    %c0_0 = arith.constant 0 : index
    %0 = vector.load %arg1[%c0, %c0_0] : memref<8x1024xbf16, #tpu.memory_space<vmem>>, vector<8x128xbf16>
    %c0_1 = arith.constant 0 : index
    %c0_2 = arith.constant 0 : index
    %1 = vector.load %arg2[%c0_1, %c0_2] : memref<128x128xbf16, #tpu.memory_space<vmem>>, vector<128x128xbf16>
    %cst = arith.constant dense<0.000000e+00> : vector<8x128xf32>
    %2 = tpu.matmul %0, %1, %cst {dimension_numbers = #tpu.dot_dimension_numbers<[1], [0], [0], [1], [0, 0, 1, 1], [], []>} : vector<8x128xbf16>, vector<128x128xbf16>, vector<8x128xf32> -> vector<8x128xf32>
    %c0_3 = arith.constant 0 : index
    %c0_4 = arith.constant 0 : index
    %3 = vector.load %arg3[%c0_3, %c0_4] : memref<1x128xf32, #tpu.memory_space<vmem>>, vector<1x128xf32>
    %4 = vector.broadcast %3 : vector<1x128xf32> to vector<8x128xf32>
    %5 = arith.addf %2, %4 : vector<8x128xf32>
    %cst_5 = arith.constant 0.000000e+00 : f32
    %6 = vector.broadcast %cst_5 : f32 to vector<8x128xf32>
    %7 = arith.maximumf %5, %6 : vector<8x128xf32>
    %8 = arith.truncf %7 : vector<8x128xf32> to vector<8x128xbf16>
    %c0_6 = arith.constant 0 : index
    %c0_7 = arith.constant 0 : index
    %9 = vector.load %arg13[%c0_6, %c0_7] : memref<8x896xbf16, #tpu.memory_space<vmem>>, vector<8x128xbf16>
    tpu.vector_store %arg13[%c0_6, %c0_7], %8 {strides = array<i32>} : memref<8x896xbf16, #tpu.memory_space<vmem>>, vector<8x128xbf16>,
    %c0_8 = arith.constant 0 : index
    %c128 = arith.constant 128 : index
    %10 = vector.load %arg1[%c0_8, %c128] : memref<8x1024xbf16, #tpu.memory_space<vmem>>, vector<8x128xbf16>
    %c0_9 = arith.constant 0 : index
    %c0_10 = arith.constant 0 : index
    %c0_11 = arith.constant 0 : index
    %11 = vector.load %arg4[%c0_9, %c0_10, %c0_11] : memref<6x128x128xbf16, #tpu.memory_space<vmem>>, vector<1x128x128xbf16>
    %12 = vector.shape_cast %11 : vector<1x128x128xbf16> to vector<128x128xbf16>
    %cst_12 = arith.constant dense<0.000000e+00> : vector<8x128xf32>
    %13 = tpu.matmul %10, %12, %cst_12 {dimension_numbers = #tpu.dot_dimension_numbers<[1], [0], [0], [1], [0, 0, 1, 1], [], []>} : vector<8x128xbf16>, vector<128x128xbf16>, vector<8x128xf32> -> vector<8x128xf32>
    %c0_13 = arith.constant 0 : index
    %c0_14 = arith.constant 0 : index
    %14 = vector.load %arg5[%c0_13, %c0_14] : memref<6x128xf32, #tpu.memory_space<vmem>>, vector<1x128xf32>
    %15 = vector.broadcast %14 : vector<1x128xf32> to vector<8x128xf32>
    %16 = arith.addf %13, %15 : vector<8x128xf32>
    %cst_15 = arith.constant 0.000000e+00 : f32
    %17 = vector.broadcast %cst_15 : f32 to vector<8x128xf32>
    %18 = arith.maximumf %16, %17 : vector<8x128xf32>
    %19 = arith.truncf %18 : vector<8x128xf32> to vector<8x128xbf16>
    %c0_16 = arith.constant 0 : index
    %c128_17 = arith.constant 128 : index
    %20 = vector.load %arg13[%c0_16, %c128_17] : memref<8x896xbf16, #tpu.memory_space<vmem>>, vector<8x128xbf16>
    tpu.vector_store %arg13[%c0_16, %c128_17], %19 {strides = array<i32>} : memref<8x896xbf16, #tpu.memory_space<vmem>>, vector<8x128xbf16>,
    %c0_18 = arith.constant 0 : index
    %c256 = arith.constant 256 : index
    %21 = vector.load %arg1[%c0_18, %c256] : memref<8x1024xbf16, #tpu.memory_space<vmem>>, vector<8x128xbf16>
    %c1 = arith.constant 1 : index
    %c0_19 = arith.constant 0 : index
    %c0_20 = arith.constant 0 : index
    %22 = vector.load %arg4[%c1, %c0_19, %c0_20] : memref<6x128x128xbf16, #tpu.memory_space<vmem>>, vector<1x128x128xbf16>
    %23 = vector.shape_cast %22 : vector<1x128x128xbf16> to vector<128x128xbf16>
    %cst_21 = arith.constant dense<0.000000e+00> : vector<8x128xf32>
    %24 = tpu.matmul %21, %23, %cst_21 {dimension_numbers = #tpu.dot_dimension_numbers<[1], [0], [0], [1], [0, 0, 1, 1], [], []>} : vector<8x128xbf16>, vector<128x128xbf16>, vector<8x128xf32> -> vector<8x128xf32>
    %c1_22 = arith.constant 1 : index
    %c0_23 = arith.constant 0 : index
    %25 = vector.load %arg5[%c1_22, %c0_23] : memref<6x128xf32, #tpu.memory_space<vmem>>, vector<1x128xf32>
    %26 = vector.broadcast %25 : vector<1x128xf32> to vector<8x128xf32>
    %27 = arith.addf %24, %26 : vector<8x128xf32>
    %cst_24 = arith.constant 0.000000e+00 : f32
    %28 = vector.broadcast %cst_24 : f32 to vector<8x128xf32>
    %29 = arith.maximumf %27, %28 : vector<8x128xf32>
    %30 = arith.truncf %29 : vector<8x128xf32> to vector<8x128xbf16>
    %c0_25 = arith.constant 0 : index
    %c256_26 = arith.constant 256 : index
    %31 = vector.load %arg13[%c0_25, %c256_26] : memref<8x896xbf16, #tpu.memory_space<vmem>>, vector<8x128xbf16>
    tpu.vector_store %arg13[%c0_25, %c256_26], %30 {strides = array<i32>} : memref<8x896xbf16, #tpu.memory_space<vmem>>, vector<8x128xbf16>,
    %c0_27 = arith.constant 0 : index
    %c384 = arith.constant 384 : index
    %32 = vector.load %arg1[%c0_27, %c384] : memref<8x1024xbf16, #tpu.memory_space<vmem>>, vector<8x128xbf16>
    %c2 = arith.constant 2 : index
    %c0_28 = arith.constant 0 : index
    %c0_29 = arith.constant 0 : index
    %33 = vector.load %arg4[%c2, %c0_28, %c0_29] : memref<6x128x128xbf16, #tpu.memory_space<vmem>>, vector<1x128x128xbf16>
    %34 = vector.shape_cast %33 : vector<1x128x128xbf16> to vector<128x128xbf16>
    %cst_30 = arith.constant dense<0.000000e+00> : vector<8x128xf32>
    %35 = tpu.matmul %32, %34, %cst_30 {dimension_numbers = #tpu.dot_dimension_numbers<[1], [0], [0], [1], [0, 0, 1, 1], [], []>} : vector<8x128xbf16>, vector<128x128xbf16>, vector<8x128xf32> -> vector<8x128xf32>
    %c2_31 = arith.constant 2 : index
    %c0_32 = arith.constant 0 : index
    %36 = vector.load %arg5[%c2_31, %c0_32] : memref<6x128xf32, #tpu.memory_space<vmem>>, vector<1x128xf32>
    %37 = vector.broadcast %36 : vector<1x128xf32> to vector<8x128xf32>
    %38 = arith.addf %35, %37 : vector<8x128xf32>
    %cst_33 = arith.constant 0.000000e+00 : f32
    %39 = vector.broadcast %cst_33 : f32 to vector<8x128xf32>
    %40 = arith.maximumf %38, %39 : vector<8x128xf32>
    %41 = arith.truncf %40 : vector<8x128xf32> to vector<8x128xbf16>
    %c0_34 = arith.constant 0 : index
    %c384_35 = arith.constant 384 : index
    %42 = vector.load %arg13[%c0_34, %c384_35] : memref<8x896xbf16, #tpu.memory_space<vmem>>, vector<8x128xbf16>
    tpu.vector_store %arg13[%c0_34, %c384_35], %41 {strides = array<i32>} : memref<8x896xbf16, #tpu.memory_space<vmem>>, vector<8x128xbf16>,
    %c0_36 = arith.constant 0 : index
    %c512 = arith.constant 512 : index
    %43 = vector.load %arg1[%c0_36, %c512] : memref<8x1024xbf16, #tpu.memory_space<vmem>>, vector<8x128xbf16>
    %c3 = arith.constant 3 : index
    %c0_37 = arith.constant 0 : index
    %c0_38 = arith.constant 0 : index
    %44 = vector.load %arg4[%c3, %c0_37, %c0_38] : memref<6x128x128xbf16, #tpu.memory_space<vmem>>, vector<1x128x128xbf16>
    %45 = vector.shape_cast %44 : vector<1x128x128xbf16> to vector<128x128xbf16>
    %cst_39 = arith.constant dense<0.000000e+00> : vector<8x128xf32>
    %46 = tpu.matmul %43, %45, %cst_39 {dimension_numbers = #tpu.dot_dimension_numbers<[1], [0], [0], [1], [0, 0, 1, 1], [], []>} : vector<8x128xbf16>, vector<128x128xbf16>, vector<8x128xf32> -> vector<8x128xf32>
    %c3_40 = arith.constant 3 : index
    %c0_41 = arith.constant 0 : index
    %47 = vector.load %arg5[%c3_40, %c0_41] : memref<6x128xf32, #tpu.memory_space<vmem>>, vector<1x128xf32>
    %48 = vector.broadcast %47 : vector<1x128xf32> to vector<8x128xf32>
    %49 = arith.addf %46, %48 : vector<8x128xf32>
    %cst_42 = arith.constant 0.000000e+00 : f32
    %50 = vector.broadcast %cst_42 : f32 to vector<8x128xf32>
    %51 = arith.maximumf %49, %50 : vector<8x128xf32>
    %52 = arith.truncf %51 : vector<8x128xf32> to vector<8x128xbf16>
    %c0_43 = arith.constant 0 : index
    %c512_44 = arith.constant 512 : index
    %53 = vector.load %arg13[%c0_43, %c512_44] : memref<8x896xbf16, #tpu.memory_space<vmem>>, vector<8x128xbf16>
    tpu.vector_store %arg13[%c0_43, %c512_44], %52 {strides = array<i32>} : memref<8x896xbf16, #tpu.memory_space<vmem>>, vector<8x128xbf16>,
    %c0_45 = arith.constant 0 : index
    %c640 = arith.constant 640 : index
    %54 = vector.load %arg1[%c0_45, %c640] : memref<8x1024xbf16, #tpu.memory_space<vmem>>, vector<8x128xbf16>
    %c4 = arith.constant 4 : index
    %c0_46 = arith.constant 0 : index
    %c0_47 = arith.constant 0 : index
    %55 = vector.load %arg4[%c4, %c0_46, %c0_47] : memref<6x128x128xbf16, #tpu.memory_space<vmem>>, vector<1x128x128xbf16>
    %56 = vector.shape_cast %55 : vector<1x128x128xbf16> to vector<128x128xbf16>
    %cst_48 = arith.constant dense<0.000000e+00> : vector<8x128xf32>
    %57 = tpu.matmul %54, %56, %cst_48 {dimension_numbers = #tpu.dot_dimension_numbers<[1], [0], [0], [1], [0, 0, 1, 1], [], []>} : vector<8x128xbf16>, vector<128x128xbf16>, vector<8x128xf32> -> vector<8x128xf32>
    %c4_49 = arith.constant 4 : index
    %c0_50 = arith.constant 0 : index
    %58 = vector.load %arg5[%c4_49, %c0_50] : memref<6x128xf32, #tpu.memory_space<vmem>>, vector<1x128xf32>
    %59 = vector.broadcast %58 : vector<1x128xf32> to vector<8x128xf32>
    %60 = arith.addf %57, %59 : vector<8x128xf32>
    %cst_51 = arith.constant 0.000000e+00 : f32
    %61 = vector.broadcast %cst_51 : f32 to vector<8x128xf32>
    %62 = arith.maximumf %60, %61 : vector<8x128xf32>
    %63 = arith.truncf %62 : vector<8x128xf32> to vector<8x128xbf16>
    %c0_52 = arith.constant 0 : index
    %c640_53 = arith.constant 640 : index
    %64 = vector.load %arg13[%c0_52, %c640_53] : memref<8x896xbf16, #tpu.memory_space<vmem>>, vector<8x128xbf16>
    tpu.vector_store %arg13[%c0_52, %c640_53], %63 {strides = array<i32>} : memref<8x896xbf16, #tpu.memory_space<vmem>>, vector<8x128xbf16>,
    %c0_54 = arith.constant 0 : index
    %c768 = arith.constant 768 : index
    %65 = vector.load %arg1[%c0_54, %c768] : memref<8x1024xbf16, #tpu.memory_space<vmem>>, vector<8x128xbf16>
    %c5 = arith.constant 5 : index
    %c0_55 = arith.constant 0 : index
    %c0_56 = arith.constant 0 : index
    %66 = vector.load %arg4[%c5, %c0_55, %c0_56] : memref<6x128x128xbf16, #tpu.memory_space<vmem>>, vector<1x128x128xbf16>
    %67 = vector.shape_cast %66 : vector<1x128x128xbf16> to vector<128x128xbf16>
    %cst_57 = arith.constant dense<0.000000e+00> : vector<8x128xf32>
    %68 = tpu.matmul %65, %67, %cst_57 {dimension_numbers = #tpu.dot_dimension_numbers<[1], [0], [0], [1], [0, 0, 1, 1], [], []>} : vector<8x128xbf16>, vector<128x128xbf16>, vector<8x128xf32> -> vector<8x128xf32>
    %c5_58 = arith.constant 5 : index
    %c0_59 = arith.constant 0 : index
    %69 = vector.load %arg5[%c5_58, %c0_59] : memref<6x128xf32, #tpu.memory_space<vmem>>, vector<1x128xf32>
    %70 = vector.broadcast %69 : vector<1x128xf32> to vector<8x128xf32>
    %71 = arith.addf %68, %70 : vector<8x128xf32>
    %cst_60 = arith.constant 0.000000e+00 : f32
    %72 = vector.broadcast %cst_60 : f32 to vector<8x128xf32>
    %73 = arith.maximumf %71, %72 : vector<8x128xf32>
    %74 = arith.truncf %73 : vector<8x128xf32> to vector<8x128xbf16>
    %c0_61 = arith.constant 0 : index
    %c768_62 = arith.constant 768 : index
    %75 = vector.load %arg13[%c0_61, %c768_62] : memref<8x896xbf16, #tpu.memory_space<vmem>>, vector<8x128xbf16>
    tpu.vector_store %arg13[%c0_61, %c768_62], %74 {strides = array<i32>} : memref<8x896xbf16, #tpu.memory_space<vmem>>, vector<8x128xbf16>,
    %c0_63 = arith.constant 0 : index
    %c0_64 = arith.constant 0 : index
    %76 = vector.load %arg13[%c0_63, %c0_64] : memref<8x896xbf16, #tpu.memory_space<vmem>>, vector<8x896xbf16>
    %c0_65 = arith.constant 0 : index
    %c0_66 = arith.constant 0 : index
    %77 = vector.load %arg6[%c0_65, %c0_66] : memref<896x256xbf16, #tpu.memory_space<vmem>>, vector<896x256xbf16>
    %cst_67 = arith.constant dense<0.000000e+00> : vector<8x256xf32>
    %78 = tpu.matmul %76, %77, %cst_67 {dimension_numbers = #tpu.dot_dimension_numbers<[1], [0], [0], [1], [0, 0, 1, 1], [], []>} : vector<8x896xbf16>, vector<896x256xbf16>, vector<8x256xf32> -> vector<8x256xf32>
    %c0_68 = arith.constant 0 : index
    %c0_69 = arith.constant 0 : index
    %79 = vector.load %arg7[%c0_68, %c0_69] : memref<1x256xf32, #tpu.memory_space<vmem>>, vector<1x256xf32>
    %80 = vector.broadcast %79 : vector<1x256xf32> to vector<8x256xf32>
    %81 = arith.addf %78, %80 : vector<8x256xf32>
    %cst_70 = arith.constant 0.000000e+00 : f32
    %82 = vector.broadcast %cst_70 : f32 to vector<8x256xf32>
    %83 = arith.maximumf %81, %82 : vector<8x256xf32>
    %84 = arith.truncf %83 : vector<8x256xf32> to vector<8x256xbf16>
    %c0_71 = arith.constant 0 : index
    %c0_72 = arith.constant 0 : index
    %85 = vector.load %arg8[%c0_71, %c0_72] : memref<256x128xbf16, #tpu.memory_space<vmem>>, vector<256x128xbf16>
    %cst_73 = arith.constant dense<0.000000e+00> : vector<8x128xf32>
    %86 = tpu.matmul %84, %85, %cst_73 {dimension_numbers = #tpu.dot_dimension_numbers<[1], [0], [0], [1], [0, 0, 1, 1], [], []>} : vector<8x256xbf16>, vector<256x128xbf16>, vector<8x128xf32> -> vector<8x128xf32>
    %c0_74 = arith.constant 0 : index
    %c0_75 = arith.constant 0 : index
    %87 = vector.load %arg9[%c0_74, %c0_75] : memref<1x128xf32, #tpu.memory_space<vmem>>, vector<1x128xf32>
    %88 = vector.broadcast %87 : vector<1x128xf32> to vector<8x128xf32>
    %89 = arith.addf %86, %88 : vector<8x128xf32>
    %cst_76 = arith.constant 0.000000e+00 : f32
    %90 = vector.broadcast %cst_76 : f32 to vector<8x128xf32>
    %91 = arith.maximumf %89, %90 : vector<8x128xf32>
    %92 = arith.truncf %91 : vector<8x128xf32> to vector<8x128xbf16>
    %c0_77 = arith.constant 0 : index
    %c0_78 = arith.constant 0 : index
    %93 = vector.load %arg10[%c0_77, %c0_78] : memref<128x64xbf16, #tpu.memory_space<vmem>>, vector<128x64xbf16>
    %cst_79 = arith.constant dense<0.000000e+00> : vector<8x64xf32>
    %94 = tpu.matmul %92, %93, %cst_79 {dimension_numbers = #tpu.dot_dimension_numbers<[1], [0], [0], [1], [0, 0, 1, 1], [], []>} : vector<8x128xbf16>, vector<128x64xbf16>, vector<8x64xf32> -> vector<8x64xf32>
    %c0_80 = arith.constant 0 : index
    %c0_81 = arith.constant 0 : index
    %95 = vector.load %arg11[%c0_80, %c0_81] : memref<1x64xf32, #tpu.memory_space<vmem>>, vector<1x64xf32>
    %96 = vector.broadcast %95 : vector<1x64xf32> to vector<8x64xf32>
    %97 = arith.addf %94, %96 : vector<8x64xf32>
    %c0_82 = arith.constant 0 : index
    %c896 = arith.constant 896 : index
    %98 = vector.load %arg1[%c0_82, %c896] : memref<8x1024xbf16, #tpu.memory_space<vmem>>, vector<8x64xbf16>
    %99 = arith.extf %98 : vector<8x64xbf16> to vector<8x64xf32>
    %100 = arith.mulf %97, %99 : vector<8x64xf32>
    %cst_83 = arith.constant 1.000000e+00 : f32
    %101 = vector.broadcast %cst_83 : f32 to vector<8x64xf32>
    %102 = arith.subf %101, %99 : vector<8x64xf32>
    %cst_84 = arith.constant -3.40282347E+38 : f32
    %103 = vector.broadcast %cst_84 : f32 to vector<8x64xf32>
    %104 = arith.mulf %102, %103 : vector<8x64xf32>
    %105 = arith.addf %100, %104 : vector<8x64xf32>
    %c0_85 = arith.constant 0 : index
    %c0_86 = arith.constant 0 : index
    %106 = vector.load %arg12[%c0_85, %c0_86] : memref<8x64xf32, #tpu.memory_space<vmem>>, vector<8x64xf32>
    tpu.vector_store %arg12[%c0_85, %c0_86], %105 {strides = array<i32>} : memref<8x64xf32, #tpu.memory_space<vmem>>, vector<8x64xf32>,
    return
  }
  func.func @transform_0(%arg0: i32) -> (i32, i32) {
    %c0_i32 = arith.constant 0 : i32
    %c0_i32_0 = arith.constant 0 : i32
    return %arg0, %c0_i32 : i32, i32
  }
  func.func @transform_1(%arg0: i32) -> (i32, i32) {
    %c0_i32 = arith.constant 0 : i32
    %c0_i32_0 = arith.constant 0 : i32
    %c0_i32_1 = arith.constant 0 : i32
    return %c0_i32, %c0_i32_0 : i32, i32
  }
  func.func @transform_2(%arg0: i32) -> (i32, i32) {
    %c0_i32 = arith.constant 0 : i32
    %c0_i32_0 = arith.constant 0 : i32
    %c0_i32_1 = arith.constant 0 : i32
    return %c0_i32, %c0_i32_0 : i32, i32
  }
  func.func @transform_3(%arg0: i32) -> (i32, i32, i32) {
    %c0_i32 = arith.constant 0 : i32
    %c0_i32_0 = arith.constant 0 : i32
    %c0_i32_1 = arith.constant 0 : i32
    %c0_i32_2 = arith.constant 0 : i32
    return %c0_i32, %c0_i32_0, %c0_i32_1 : i32, i32, i32
  }
  func.func @transform_4(%arg0: i32) -> (i32, i32) {
    %c0_i32 = arith.constant 0 : i32
    %c0_i32_0 = arith.constant 0 : i32
    %c0_i32_1 = arith.constant 0 : i32
    return %c0_i32, %c0_i32_0 : i32, i32
  }
  func.func @transform_5(%arg0: i32) -> (i32, i32) {
    %c0_i32 = arith.constant 0 : i32
    %c0_i32_0 = arith.constant 0 : i32
    %c0_i32_1 = arith.constant 0 : i32
    return %c0_i32, %c0_i32_0 : i32, i32
  }
  func.func @transform_6(%arg0: i32) -> (i32, i32) {
    %c0_i32 = arith.constant 0 : i32
    %c0_i32_0 = arith.constant 0 : i32
    %c0_i32_1 = arith.constant 0 : i32
    return %c0_i32, %c0_i32_0 : i32, i32
  }
  func.func @transform_7(%arg0: i32) -> (i32, i32) {
    %c0_i32 = arith.constant 0 : i32
    %c0_i32_0 = arith.constant 0 : i32
    %c0_i32_1 = arith.constant 0 : i32
    return %c0_i32, %c0_i32_0 : i32, i32
  }
  func.func @transform_8(%arg0: i32) -> (i32, i32) {
    %c0_i32 = arith.constant 0 : i32
    %c0_i32_0 = arith.constant 0 : i32
    %c0_i32_1 = arith.constant 0 : i32
    return %c0_i32, %c0_i32_0 : i32, i32
  }
  func.func @transform_9(%arg0: i32) -> (i32, i32) {
    %c0_i32 = arith.constant 0 : i32
    %c0_i32_0 = arith.constant 0 : i32
    %c0_i32_1 = arith.constant 0 : i32
    return %c0_i32, %c0_i32_0 : i32, i32
  }
  func.func @transform_10(%arg0: i32) -> (i32, i32) {
    %c0_i32 = arith.constant 0 : i32
    %c0_i32_0 = arith.constant 0 : i32
    %c0_i32_1 = arith.constant 0 : i32
    return %c0_i32, %c0_i32_0 : i32, i32
  }
  func.func @transform_11(%arg0: i32) -> (i32, i32) {
    %c0_i32 = arith.constant 0 : i32
    %c0_i32_0 = arith.constant 0 : i32
    return %arg0, %c0_i32 : i32, i32
  }
}

</mosaic_0001>

<llo_original>
// kernel: model_forward.1
$region0: #{model_forward.1}
  #allocation0 [shape = 'u32[]', space=smem, size = 0x4, offset = 0x4, fixed_abs, tag = 'smem constant byte address 0x4 - core index']
  #allocation1 [shape = 'u32[144,128]{1,0:T(1,128)}', space=vmem, size = 0x12000, scoped, tag = 'internal scratch']
  #allocation2 [shape = 'bf16[8,896]{1,0:T(8,128)(2,1)}', space=vmem, size = 0x3800, scoped, tag = 'scratch operand']
  %s0 = inlined_call_operand.vmem [shape: bf16[8,1024], index: 0, kind: input, shape index: {}]
  %s1 = inlined_call_operand.vmem [shape: bf16[128,128], index: 1, kind: input, shape index: {}]
  %s2 = inlined_call_operand.vmem [shape: f32[1,128], index: 2, kind: input, shape index: {}]
  %s3 = inlined_call_operand.hbm [shape: bf16[6,128,128], index: 3, kind: input, shape index: {}]
  %s4 = inlined_call_operand.vmem [shape: f32[6,128], index: 4, kind: input, shape index: {}]
  %s5 = inlined_call_operand.hbm [shape: bf16[896,256], index: 5, kind: input, shape index: {}]
  %s6 = inlined_call_operand.vmem [shape: f32[1,256], index: 6, kind: input, shape index: {}]
  %s7 = inlined_call_operand.vmem [shape: bf16[256,128], index: 7, kind: input, shape index: {}]
  %s8 = inlined_call_operand.vmem [shape: f32[1,128], index: 8, kind: input, shape index: {}]
  %s9 = inlined_call_operand.vmem [shape: bf16[128,64], index: 9, kind: input, shape index: {}]
  %s10 = inlined_call_operand.vmem [shape: f32[1,64], index: 10, kind: input, shape index: {}]
  %s11 = inlined_call_operand.vmem [shape: f32[8,64], index: 11, kind: output, shape index: {}]
  %s12 = sld [smem:[#allocation0]]
  $region62: #{model_forward.1} parent=0
    _
  %s14 = ssub.s32 1, %s12
  %s15 = scalar_select 0, %s14, %s12
  $region1: #{model_forward.1} parent=0
    #allocation3 [shape = 'u8[196608]{0}', space=vmem, size = 0x30000, scoped, tag = 'input window, operand 3, single buffered']
    #allocation4 [shape = 's32[1]{0}', space=sflag, size = 0x4, scoped, tag = 'scoped memory for model_forward.1']
    #allocation5 [shape = 'u8[458752]{0}', space=vmem, size = 0x70000, scoped, tag = 'input window, operand 5, single buffered']
    #allocation6 [shape = 's32[1]{0}', space=sflag, size = 0x4, scoped, tag = 'scoped memory for model_forward.1']
    %16 = vsyncpa [#allocation4], 0
    %17 = vsyncpa [#allocation6], 0
    // Predicated region
    $region2: #{model_forward.1} parent=1 // pred_check
      _
    $region3: #{model_forward.1} parent=1 // pred_check_branch
      %19 = sbr.rel (0) target = $region5
    $region4: #{model_forward.1} parent=1 // pred_region
      _
    $region5: #{model_forward.1} parent=1 // pred_fallthru
      _
    // Predicated region
    $region6: #{model_forward.1} parent=1 // pred_check
      _
    $region7: #{model_forward.1} parent=1 // pred_check_branch
      %21 = sbr.rel (0) target = $region9
    $region8: #{model_forward.1} parent=1 // pred_region
      _
    $region9: #{model_forward.1} parent=1 // pred_fallthru
      _
    // Predicated region
    $region10: #{model_forward.1} parent=1 // pred_check
      _
    $region11: #{model_forward.1} parent=1 // pred_check_branch
      %23 = sbr.rel (0) target = $region13
    $region12: #{model_forward.1} parent=1 // pred_region
      _
    $region13: #{model_forward.1} parent=1 // pred_fallthru
      _
    // Predicated region
    $region14: #{model_forward.1} parent=1 // pred_check
      _
    $region15: #{model_forward.1} parent=1 // pred_check_branch
      %25 = sbr.rel (0) target = $region17
    $region16: #{model_forward.1} parent=1 // pred_region
      %s27 = ssub.s32 6144, 6144
      %28 = vsyncadd [#allocation4], %s27
      %s29 = sshll.u32 [#allocation3], 4
      %s30 = int_to_ptr.vmem [resolvable:$true] %s29
      %35 = dma.hbm_to_vmem [thread:$0]  %s3, 6144, %s30, [#allocation4], 64, 64, 4
    $region17: #{model_forward.1} parent=1 // pred_fallthru
      _
    // Predicated region
    $region18: #{model_forward.1} parent=1 // pred_check
      _
    $region19: #{model_forward.1} parent=1 // pred_check_branch
      %37 = sbr.rel (0) target = $region21
    $region20: #{model_forward.1} parent=1 // pred_region
      _
    $region21: #{model_forward.1} parent=1 // pred_fallthru
      _
    // Predicated region
    $region22: #{model_forward.1} parent=1 // pred_check
      _
    $region23: #{model_forward.1} parent=1 // pred_check_branch
      %39 = sbr.rel (0) target = $region25
    $region24: #{model_forward.1} parent=1 // pred_region
      %s41 = ssub.s32 14336, 14336
      %42 = vsyncadd [#allocation6], %s41
      %s43 = sshll.u32 [#allocation5], 4
      %s44 = int_to_ptr.vmem [resolvable:$true] %s43
      %49 = dma.hbm_to_vmem [thread:$0]  %s5, 14336, %s44, [#allocation6], 128, 128, 8
    $region25: #{model_forward.1} parent=1 // pred_fallthru
      _
    // Predicated region
    $region26: #{model_forward.1} parent=1 // pred_check
      _
    $region27: #{model_forward.1} parent=1 // pred_check_branch
      %51 = sbr.rel (0) target = $region29
    $region28: #{model_forward.1} parent=1 // pred_region
      _
    $region29: #{model_forward.1} parent=1 // pred_fallthru
      _
    // Predicated region
    $region30: #{model_forward.1} parent=1 // pred_check
      _
    $region31: #{model_forward.1} parent=1 // pred_check_branch
      %53 = sbr.rel (0) target = $region33
    $region32: #{model_forward.1} parent=1 // pred_region
      _
    $region33: #{model_forward.1} parent=1 // pred_fallthru
      _
    // Predicated region
    $region34: #{model_forward.1} parent=1 // pred_check
      _
    $region35: #{model_forward.1} parent=1 // pred_check_branch
      %55 = sbr.rel (0) target = $region37
    $region36: #{model_forward.1} parent=1 // pred_region
      _
    $region37: #{model_forward.1} parent=1 // pred_fallthru
      _
    // Predicated region
    $region38: #{model_forward.1} parent=1 // pred_check
      _
    $region39: #{model_forward.1} parent=1 // pred_check_branch
      %57 = sbr.rel (0) target = $region41
    $region40: #{model_forward.1} parent=1 // pred_region
      _
    $region41: #{model_forward.1} parent=1 // pred_fallthru
      _
    // Predicated region
    $region42: #{model_forward.1} parent=1 // pred_check
      _
    $region43: #{model_forward.1} parent=1 // pred_check_branch
      %59 = sbr.rel (0) target = $region45
    $region44: #{model_forward.1} parent=1 // pred_region
      _
    $region45: #{model_forward.1} parent=1 // pred_fallthru
      _
    // Predicated region
    $region46: #{model_forward.1} parent=1 // pred_check
      _
    $region47: #{model_forward.1} parent=1 // pred_check_branch
      %61 = sbr.rel (0) target = $region49
    $region48: #{model_forward.1} parent=1 // pred_region
      %62 = dma.done [#allocation4], 6144
    $region49: #{model_forward.1} parent=1 // pred_fallthru
      _
    // Predicated region
    $region50: #{model_forward.1} parent=1 // pred_check
      _
    $region51: #{model_forward.1} parent=1 // pred_check_branch
      %64 = sbr.rel (0) target = $region53
    $region52: #{model_forward.1} parent=1 // pred_region
      %65 = dma.done [#allocation6], 14336
    $region53: #{model_forward.1} parent=1 // pred_fallthru
      _
    %v67 = vld [vmem:[%s0] sm:$0xf]
    %v68 = vld [vmem:[%s1] sm:$0xf]
    %v69 = vld [vmem:[%s1 + $0x4] sm:$0xf]
    %v70 = vld [vmem:[%s1 + $0x8] sm:$0xf]
    %v71 = vld [vmem:[%s1 + $0xc] sm:$0xf]
    %v72 = vld [vmem:[%s1 + $0x10] sm:$0xf]
    %v73 = vld [vmem:[%s1 + $0x14] sm:$0xf]
    %v74 = vld [vmem:[%s1 + $0x18] sm:$0xf]
    %v75 = vld [vmem:[%s1 + $0x1c] sm:$0xf]
    %v76 = vld [vmem:[%s1 + $0x20] sm:$0xf]
    %v77 = vld [vmem:[%s1 + $0x24] sm:$0xf]
    %v78 = vld [vmem:[%s1 + $0x28] sm:$0xf]
    %v79 = vld [vmem:[%s1 + $0x2c] sm:$0xf]
    %v80 = vld [vmem:[%s1 + $0x30] sm:$0xf]
    %v81 = vld [vmem:[%s1 + $0x34] sm:$0xf]
    %v82 = vld [vmem:[%s1 + $0x38] sm:$0xf]
    %v83 = vld [vmem:[%s1 + $0x3c] sm:$0xf]
    %v84 = vld [vmem:[%s2] sm:$0x1]
    %v86 = vlaneseq
    %v87 = vshrl.u32 %v86, 7
    %v88 = vsub.s32 0, %v87
    %v89 = vrot.slane %v84, %v88
    %v107 = vunpack.c.l.b16 %v68
    %v108 = vunpack.c.l.b16 %v69
    %v109 = vunpack.c.l.b16 %v70
    %v110 = vunpack.c.l.b16 %v71
    %v111 = vunpack.c.l.b16 %v72
    %v112 = vunpack.c.l.b16 %v73
    %v113 = vunpack.c.l.b16 %v74
    %v114 = vunpack.c.l.b16 %v75
    %v115 = vunpack.c.l.b16 %v76
    %v116 = vunpack.c.l.b16 %v77
    %v117 = vunpack.c.l.b16 %v78
    %v118 = vunpack.c.l.b16 %v79
    %v119 = vunpack.c.l.b16 %v80
    %v120 = vunpack.c.l.b16 %v81
    %v121 = vunpack.c.l.b16 %v82
    %v122 = vunpack.c.l.b16 %v83
    %v123 = vpack.c.b16 %v108, %v107
    %v124 = vpack.c.b16 %v110, %v109
    %v125 = vpack.c.b16 %v112, %v111
    %v126 = vpack.c.b16 %v114, %v113
    %v127 = vpack.c.b16 %v116, %v115
    %v128 = vpack.c.b16 %v118, %v117
    %v129 = vpack.c.b16 %v120, %v119
    %v130 = vpack.c.b16 %v122, %v121
    %139 = vmatprep.subr.bf16.mxu0 0
    %140 = vmatpush1.bf16.msra.mxu0 %v123
    %141 = vmatprep.subr.bf16.mxu0 0
    %142 = vmatpush1.bf16.msra.mxu0 %v124
    %143 = vmatprep.subr.bf16.mxu0 0
    %144 = vmatpush1.bf16.msra.mxu0 %v125
    %145 = vmatprep.subr.bf16.mxu0 0
    %146 = vmatpush1.bf16.msra.mxu0 %v126
    %147 = vmatprep.subr.bf16.mxu0 0
    %148 = vmatpush1.bf16.msra.mxu0 %v127
    %149 = vmatprep.subr.bf16.mxu0 0
    %150 = vmatpush1.bf16.msra.mxu0 %v128
    %151 = vmatprep.subr.bf16.mxu0 0
    %152 = vmatpush1.bf16.msra.mxu0 %v129
    %153 = vmatprep.subr.bf16.mxu0 0
    %154 = vmatpush1.bf16.msra.mxu0 %v130
    %155 = vmatprep.subr.bf16.mxu0 0
    %156 = vmatpush1.bf16.msra.mxu0 0
    %157 = vmatprep.subr.bf16.mxu0 0
    %158 = vmatpush1.bf16.msra.mxu0 0
    %159 = vmatprep.subr.bf16.mxu0 0
    %160 = vmatpush1.bf16.msra.mxu0 0
    %161 = vmatprep.subr.bf16.mxu0 0
    %162 = vmatpush1.bf16.msra.mxu0 0
    %163 = vmatprep.subr.bf16.mxu0 0
    %164 = vmatpush1.bf16.msra.mxu0 0
    %165 = vmatprep.subr.bf16.mxu0 0
    %166 = vmatpush1.bf16.msra.mxu0 0
    %167 = vmatprep.subr.bf16.mxu0 0
    %168 = vmatpush1.bf16.msra.mxu0 0
    %169 = vmatprep.subr.bf16.mxu0 0
    %170 = vmatpush1.bf16.msra.mxu0 0
    %171 = vmatprep.mubr.bf16.mxu0 0
    %172 = vmatmul.mubr.bf16.gmra.mrb[0].mxu0 %v67
    %v173 = vpop.f32.mrb[0].mxu0
    %v174 = vadd.f32 %v89, %v173
    %v175 = vpop.f32.mrb[0].mxu0
    %v176 = vpop.f32.mrb[0].mxu0
    %v177 = vpop.f32.mrb[0].mxu0
    %178 = vdwg.mxu0
    %v179 = vmax.f32 %v174, 0.0
    %v180 = vpack.c.bf16 %v179, %v179
    %181 = vst [vmem:[#allocation2] sm:$0xf] %v180
    %v182 = vld [vmem:[%s0 + $0x4] sm:$0xf]
    %v183 = vld [vmem:[#allocation3] sm:$0xf]
    %v184 = vld [vmem:[#allocation3 + $0x4] sm:$0xf]
    %v185 = vld [vmem:[#allocation3 + $0x8] sm:$0xf]
    %v186 = vld [vmem:[#allocation3 + $0xc] sm:$0xf]
    %v187 = vld [vmem:[#allocation3 + $0x10] sm:$0xf]
    %v188 = vld [vmem:[#allocation3 + $0x14] sm:$0xf]
    %v189 = vld [vmem:[#allocation3 + $0x18] sm:$0xf]
    %v190 = vld [vmem:[#allocation3 + $0x1c] sm:$0xf]
    %v191 = vld [vmem:[#allocation3 + $0x20] sm:$0xf]
    %v192 = vld [vmem:[#allocation3 + $0x24] sm:$0xf]
    %v193 = vld [vmem:[#allocation3 + $0x28] sm:$0xf]
    %v194 = vld [vmem:[#allocation3 + $0x2c] sm:$0xf]
    %v195 = vld [vmem:[#allocation3 + $0x30] sm:$0xf]
    %v196 = vld [vmem:[#allocation3 + $0x34] sm:$0xf]
    %v197 = vld [vmem:[#allocation3 + $0x38] sm:$0xf]
    %v198 = vld [vmem:[#allocation3 + $0x3c] sm:$0xf]
    %v199 = vld [vmem:[%s4] sm:$0x1]
    %v200 = vlaneseq
    %v201 = vshrl.u32 %v200, 7
    %v202 = vsub.s32 0, %v201
    %v203 = vrot.slane %v199, %v202
    %v220 = vunpack.c.l.b16 %v183
    %v221 = vunpack.c.l.b16 %v184
    %v222 = vunpack.c.l.b16 %v185
    %v223 = vunpack.c.l.b16 %v186
    %v224 = vunpack.c.l.b16 %v187
    %v225 = vunpack.c.l.b16 %v188
    %v226 = vunpack.c.l.b16 %v189
    %v227 = vunpack.c.l.b16 %v190
    %v228 = vunpack.c.l.b16 %v191
    %v229 = vunpack.c.l.b16 %v192
    %v230 = vunpack.c.l.b16 %v193
    %v231 = vunpack.c.l.b16 %v194
    %v232 = vunpack.c.l.b16 %v195
    %v233 = vunpack.c.l.b16 %v196
    %v234 = vunpack.c.l.b16 %v197
    %v235 = vunpack.c.l.b16 %v198
    %v236 = vpack.c.b16 %v221, %v220
    %v237 = vpack.c.b16 %v223, %v222
    %v238 = vpack.c.b16 %v225, %v224
    %v239 = vpack.c.b16 %v227, %v226
    %v240 = vpack.c.b16 %v229, %v228
    %v241 = vpack.c.b16 %v231, %v230
    %v242 = vpack.c.b16 %v233, %v232
    %v243 = vpack.c.b16 %v235, %v234
    %252 = vmatprep.subr.bf16.mxu0 0
    %253 = vmatpush1.bf16.msra.mxu0 %v236
    %254 = vmatprep.subr.bf16.mxu0 0
    %255 = vmatpush1.bf16.msra.mxu0 %v237
    %256 = vmatprep.subr.bf16.mxu0 0
    %257 = vmatpush1.bf16.msra.mxu0 %v238
    %258 = vmatprep.subr.bf16.mxu0 0
    %259 = vmatpush1.bf16.msra.mxu0 %v239
    %260 = vmatprep.subr.bf16.mxu0 0
    %261 = vmatpush1.bf16.msra.mxu0 %v240
    %262 = vmatprep.subr.bf16.mxu0 0
    %263 = vmatpush1.bf16.msra.mxu0 %v241
    %264 = vmatprep.subr.bf16.mxu0 0
    %265 = vmatpush1.bf16.msra.mxu0 %v242
    %266 = vmatprep.subr.bf16.mxu0 0
    %267 = vmatpush1.bf16.msra.mxu0 %v243
    %268 = vmatprep.subr.bf16.mxu0 0
    %269 = vmatpush1.bf16.msra.mxu0 0
    %270 = vmatprep.subr.bf16.mxu0 0
    %271 = vmatpush1.bf16.msra.mxu0 0
    %272 = vmatprep.subr.bf16.mxu0 0
    %273 = vmatpush1.bf16.msra.mxu0 0
    %274 = vmatprep.subr.bf16.mxu0 0
    %275 = vmatpush1.bf16.msra.mxu0 0
    %276 = vmatprep.subr.bf16.mxu0 0
    %277 = vmatpush1.bf16.msra.mxu0 0
    %278 = vmatprep.subr.bf16.mxu0 0
    %279 = vmatpush1.bf16.msra.mxu0 0
    %280 = vmatprep.subr.bf16.mxu0 0
    %281 = vmatpush1.bf16.msra.mxu0 0
    %282 = vmatprep.subr.bf16.mxu0 0
    %283 = vmatpush1.bf16.msra.mxu0 0
    %284 = vmatprep.mubr.bf16.mxu0 0
    %285 = vmatmul.mubr.bf16.gmra.mrb[0].mxu0 %v182
    %v286 = vpop.f32.mrb[0].mxu0
    %v287 = vadd.f32 %v203, %v286
    %v288 = vpop.f32.mrb[0].mxu0
    %v289 = vpop.f32.mrb[0].mxu0
    %v290 = vpop.f32.mrb[0].mxu0
    %291 = vdwg.mxu0
    %v292 = vmax.f32 %v287, 0.0
    %v293 = vpack.c.bf16 %v292, %v292
    %294 = vst [vmem:[#allocation2 + $0x4] sm:$0xf] %v293
    %v295 = vld [vmem:[%s0 + $0x8] sm:$0xf]
    %s296 = scalar_lea.vmem [#allocation3], 64
    %v297 = vld [vmem:[%s296] sm:$0xf]
    %v298 = vld [vmem:[%s296 + $0x4] sm:$0xf]
    %v299 = vld [vmem:[%s296 + $0x8] sm:$0xf]
    %v300 = vld [vmem:[%s296 + $0xc] sm:$0xf]
    %v301 = vld [vmem:[%s296 + $0x10] sm:$0xf]
    %v302 = vld [vmem:[%s296 + $0x14] sm:$0xf]
    %v303 = vld [vmem:[%s296 + $0x18] sm:$0xf]
    %v304 = vld [vmem:[%s296 + $0x1c] sm:$0xf]
    %v305 = vld [vmem:[%s296 + $0x20] sm:$0xf]
    %v306 = vld [vmem:[%s296 + $0x24] sm:$0xf]
    %v307 = vld [vmem:[%s296 + $0x28] sm:$0xf]
    %v308 = vld [vmem:[%s296 + $0x2c] sm:$0xf]
    %v309 = vld [vmem:[%s296 + $0x30] sm:$0xf]
    %v310 = vld [vmem:[%s296 + $0x34] sm:$0xf]
    %v311 = vld [vmem:[%s296 + $0x38] sm:$0xf]
    %v312 = vld [vmem:[%s296 + $0x3c] sm:$0xf]
    %v313 = vld [vmem:[%s4 + $0x1] sm:$0x1]
    %v314 = vlaneseq
    %v315 = vshrl.u32 %v314, 7
    %v316 = vsub.s32 0, %v315
    %v317 = vrot.slane %v313, %v316
    %v334 = vunpack.c.l.b16 %v297
    %v335 = vunpack.c.l.b16 %v298
    %v336 = vunpack.c.l.b16 %v299
    %v337 = vunpack.c.l.b16 %v300
    %v338 = vunpack.c.l.b16 %v301
    %v339 = vunpack.c.l.b16 %v302
    %v340 = vunpack.c.l.b16 %v303
    %v341 = vunpack.c.l.b16 %v304
    %v342 = vunpack.c.l.b16 %v305
    %v343 = vunpack.c.l.b16 %v306
    %v344 = vunpack.c.l.b16 %v307
    %v345 = vunpack.c.l.b16 %v308
    %v346 = vunpack.c.l.b16 %v309
    %v347 = vunpack.c.l.b16 %v310
    %v348 = vunpack.c.l.b16 %v311
    %v349 = vunpack.c.l.b16 %v312
    %v350 = vpack.c.b16 %v335, %v334
    %v351 = vpack.c.b16 %v337, %v336
    %v352 = vpack.c.b16 %v339, %v338
    %v353 = vpack.c.b16 %v341, %v340
    %v354 = vpack.c.b16 %v343, %v342
    %v355 = vpack.c.b16 %v345, %v344
    %v356 = vpack.c.b16 %v347, %v346
    %v357 = vpack.c.b16 %v349, %v348
    %366 = vmatprep.subr.bf16.mxu0 0
    %367 = vmatpush1.bf16.msra.mxu0 %v350
    %368 = vmatprep.subr.bf16.mxu0 0
    %369 = vmatpush1.bf16.msra.mxu0 %v351
    %370 = vmatprep.subr.bf16.mxu0 0
    %371 = vmatpush1.bf16.msra.mxu0 %v352
    %372 = vmatprep.subr.bf16.mxu0 0
    %373 = vmatpush1.bf16.msra.mxu0 %v353
    %374 = vmatprep.subr.bf16.mxu0 0
    %375 = vmatpush1.bf16.msra.mxu0 %v354
    %376 = vmatprep.subr.bf16.mxu0 0
    %377 = vmatpush1.bf16.msra.mxu0 %v355
    %378 = vmatprep.subr.bf16.mxu0 0
    %379 = vmatpush1.bf16.msra.mxu0 %v356
    %380 = vmatprep.subr.bf16.mxu0 0
    %381 = vmatpush1.bf16.msra.mxu0 %v357
    %382 = vmatprep.subr.bf16.mxu0 0
    %383 = vmatpush1.bf16.msra.mxu0 0
    %384 = vmatprep.subr.bf16.mxu0 0
    %385 = vmatpush1.bf16.msra.mxu0 0
    %386 = vmatprep.subr.bf16.mxu0 0
    %387 = vmatpush1.bf16.msra.mxu0 0
    %388 = vmatprep.subr.bf16.mxu0 0
    %389 = vmatpush1.bf16.msra.mxu0 0
    %390 = vmatprep.subr.bf16.mxu0 0
    %391 = vmatpush1.bf16.msra.mxu0 0
    %392 = vmatprep.subr.bf16.mxu0 0
    %393 = vmatpush1.bf16.msra.mxu0 0
    %394 = vmatprep.subr.bf16.mxu0 0
    %395 = vmatpush1.bf16.msra.mxu0 0
    %396 = vmatprep.subr.bf16.mxu0 0
    %397 = vmatpush1.bf16.msra.mxu0 0
    %398 = vmatprep.mubr.bf16.mxu0 0
    %399 = vmatmul.mubr.bf16.gmra.mrb[0].mxu0 %v295
    %v400 = vpop.f32.mrb[0].mxu0
    %v401 = vadd.f32 %v317, %v400
    %v402 = vpop.f32.mrb[0].mxu0
    %v403 = vpop.f32.mrb[0].mxu0
    %v404 = vpop.f32.mrb[0].mxu0
    %405 = vdwg.mxu0
    %v406 = vmax.f32 %v401, 0.0
    %v407 = vpack.c.bf16 %v406, %v406
    %408 = vst [vmem:[#allocation2 + $0x8] sm:$0xf] %v407
    %v409 = vld [vmem:[%s0 + $0xc] sm:$0xf]
    %s410 = scalar_lea.vmem [#allocation3], 128
    %v411 = vld [vmem:[%s410] sm:$0xf]
    %v412 = vld [vmem:[%s410 + $0x4] sm:$0xf]
    %v413 = vld [vmem:[%s410 + $0x8] sm:$0xf]
    %v414 = vld [vmem:[%s410 + $0xc] sm:$0xf]
    %v415 = vld [vmem:[%s410 + $0x10] sm:$0xf]
    %v416 = vld [vmem:[%s410 + $0x14] sm:$0xf]
    %v417 = vld [vmem:[%s410 + $0x18] sm:$0xf]
    %v418 = vld [vmem:[%s410 + $0x1c] sm:$0xf]
    %v419 = vld [vmem:[%s410 + $0x20] sm:$0xf]
    %v420 = vld [vmem:[%s410 + $0x24] sm:$0xf]
    %v421 = vld [vmem:[%s410 + $0x28] sm:$0xf]
    %v422 = vld [vmem:[%s410 + $0x2c] sm:$0xf]
    %v423 = vld [vmem:[%s410 + $0x30] sm:$0xf]
    %v424 = vld [vmem:[%s410 + $0x34] sm:$0xf]
    %v425 = vld [vmem:[%s410 + $0x38] sm:$0xf]
    %v426 = vld [vmem:[%s410 + $0x3c] sm:$0xf]
    %v427 = vld [vmem:[%s4 + $0x2] sm:$0x1]
    %v428 = vlaneseq
    %v429 = vshrl.u32 %v428, 7
    %v430 = vsub.s32 0, %v429
    %v431 = vrot.slane %v427, %v430
    %v448 = vunpack.c.l.b16 %v411
    %v449 = vunpack.c.l.b16 %v412
    %v450 = vunpack.c.l.b16 %v413
    %v451 = vunpack.c.l.b16 %v414
    %v452 = vunpack.c.l.b16 %v415
    %v453 = vunpack.c.l.b16 %v416
    %v454 = vunpack.c.l.b16 %v417
    %v455 = vunpack.c.l.b16 %v418
    %v456 = vunpack.c.l.b16 %v419
    %v457 = vunpack.c.l.b16 %v420
    %v458 = vunpack.c.l.b16 %v421
    %v459 = vunpack.c.l.b16 %v422
    %v460 = vunpack.c.l.b16 %v423
    %v461 = vunpack.c.l.b16 %v424
    %v462 = vunpack.c.l.b16 %v425
    %v463 = vunpack.c.l.b16 %v426
    %v464 = vpack.c.b16 %v449, %v448
    %v465 = vpack.c.b16 %v451, %v450
    %v466 = vpack.c.b16 %v453, %v452
    %v467 = vpack.c.b16 %v455, %v454
    %v468 = vpack.c.b16 %v457, %v456
    %v469 = vpack.c.b16 %v459, %v458
    %v470 = vpack.c.b16 %v461, %v460
    %v471 = vpack.c.b16 %v463, %v462
    %480 = vmatprep.subr.bf16.mxu0 0
    %481 = vmatpush1.bf16.msra.mxu0 %v464
    %482 = vmatprep.subr.bf16.mxu0 0
    %483 = vmatpush1.bf16.msra.mxu0 %v465
    %484 = vmatprep.subr.bf16.mxu0 0
    %485 = vmatpush1.bf16.msra.mxu0 %v466
    %486 = vmatprep.subr.bf16.mxu0 0
    %487 = vmatpush1.bf16.msra.mxu0 %v467
    %488 = vmatprep.subr.bf16.mxu0 0
    %489 = vmatpush1.bf16.msra.mxu0 %v468
    %490 = vmatprep.subr.bf16.mxu0 0
    %491 = vmatpush1.bf16.msra.mxu0 %v469
    %492 = vmatprep.subr.bf16.mxu0 0
    %493 = vmatpush1.bf16.msra.mxu0 %v470
    %494 = vmatprep.subr.bf16.mxu0 0
    %495 = vmatpush1.bf16.msra.mxu0 %v471
    %496 = vmatprep.subr.bf16.mxu0 0
    %497 = vmatpush1.bf16.msra.mxu0 0
    %498 = vmatprep.subr.bf16.mxu0 0
    %499 = vmatpush1.bf16.msra.mxu0 0
    %500 = vmatprep.subr.bf16.mxu0 0
    %501 = vmatpush1.bf16.msra.mxu0 0
    %502 = vmatprep.subr.bf16.mxu0 0
    %503 = vmatpush1.bf16.msra.mxu0 0
    %504 = vmatprep.subr.bf16.mxu0 0
    %505 = vmatpush1.bf16.msra.mxu0 0
    %506 = vmatprep.subr.bf16.mxu0 0
    %507 = vmatpush1.bf16.msra.mxu0 0
    %508 = vmatprep.subr.bf16.mxu0 0
    %509 = vmatpush1.bf16.msra.mxu0 0
    %510 = vmatprep.subr.bf16.mxu0 0
    %511 = vmatpush1.bf16.msra.mxu0 0
    %512 = vmatprep.mubr.bf16.mxu0 0
    %513 = vmatmul.mubr.bf16.gmra.mrb[0].mxu0 %v409
    %v514 = vpop.f32.mrb[0].mxu0
    %v515 = vadd.f32 %v431, %v514
    %v516 = vpop.f32.mrb[0].mxu0
    %v517 = vpop.f32.mrb[0].mxu0
    %v518 = vpop.f32.mrb[0].mxu0
    %519 = vdwg.mxu0
    %v520 = vmax.f32 %v515, 0.0
    %v521 = vpack.c.bf16 %v520, %v520
    %522 = vst [vmem:[#allocation2 + $0xc] sm:$0xf] %v521
    %v523 = vld [vmem:[%s0 + $0x10] sm:$0xf]
    %s524 = scalar_lea.vmem [#allocation3], 192
    %v525 = vld [vmem:[%s524] sm:$0xf]
    %v526 = vld [vmem:[%s524 + $0x4] sm:$0xf]
    %v527 = vld [vmem:[%s524 + $0x8] sm:$0xf]
    %v528 = vld [vmem:[%s524 + $0xc] sm:$0xf]
    %v529 = vld [vmem:[%s524 + $0x10] sm:$0xf]
    %v530 = vld [vmem:[%s524 + $0x14] sm:$0xf]
    %v531 = vld [vmem:[%s524 + $0x18] sm:$0xf]
    %v532 = vld [vmem:[%s524 + $0x1c] sm:$0xf]
    %v533 = vld [vmem:[%s524 + $0x20] sm:$0xf]
    %v534 = vld [vmem:[%s524 + $0x24] sm:$0xf]
    %v535 = vld [vmem:[%s524 + $0x28] sm:$0xf]
    %v536 = vld [vmem:[%s524 + $0x2c] sm:$0xf]
    %v537 = vld [vmem:[%s524 + $0x30] sm:$0xf]
    %v538 = vld [vmem:[%s524 + $0x34] sm:$0xf]
    %v539 = vld [vmem:[%s524 + $0x38] sm:$0xf]
    %v540 = vld [vmem:[%s524 + $0x3c] sm:$0xf]
    %v541 = vld [vmem:[%s4 + $0x3] sm:$0x1]
    %v542 = vlaneseq
    %v543 = vshrl.u32 %v542, 7
    %v544 = vsub.s32 0, %v543
    %v545 = vrot.slane %v541, %v544
    %v562 = vunpack.c.l.b16 %v525
    %v563 = vunpack.c.l.b16 %v526
    %v564 = vunpack.c.l.b16 %v527
    %v565 = vunpack.c.l.b16 %v528
    %v566 = vunpack.c.l.b16 %v529
    %v567 = vunpack.c.l.b16 %v530
    %v568 = vunpack.c.l.b16 %v531
    %v569 = vunpack.c.l.b16 %v532
    %v570 = vunpack.c.l.b16 %v533
    %v571 = vunpack.c.l.b16 %v534
    %v572 = vunpack.c.l.b16 %v535
    %v573 = vunpack.c.l.b16 %v536
    %v574 = vunpack.c.l.b16 %v537
    %v575 = vunpack.c.l.b16 %v538
    %v576 = vunpack.c.l.b16 %v539
    %v577 = vunpack.c.l.b16 %v540
    %v578 = vpack.c.b16 %v563, %v562
    %v579 = vpack.c.b16 %v565, %v564
    %v580 = vpack.c.b16 %v567, %v566
    %v581 = vpack.c.b16 %v569, %v568
    %v582 = vpack.c.b16 %v571, %v570
    %v583 = vpack.c.b16 %v573, %v572
    %v584 = vpack.c.b16 %v575, %v574
    %v585 = vpack.c.b16 %v577, %v576
    %594 = vmatprep.subr.bf16.mxu0 0
    %595 = vmatpush1.bf16.msra.mxu0 %v578
    %596 = vmatprep.subr.bf16.mxu0 0
    %597 = vmatpush1.bf16.msra.mxu0 %v579
    %598 = vmatprep.subr.bf16.mxu0 0
    %599 = vmatpush1.bf16.msra.mxu0 %v580
    %600 = vmatprep.subr.bf16.mxu0 0
    %601 = vmatpush1.bf16.msra.mxu0 %v581
    %602 = vmatprep.subr.bf16.mxu0 0
    %603 = vmatpush1.bf16.msra.mxu0 %v582
    %604 = vmatprep.subr.bf16.mxu0 0
    %605 = vmatpush1.bf16.msra.mxu0 %v583
    %606 = vmatprep.subr.bf16.mxu0 0
    %607 = vmatpush1.bf16.msra.mxu0 %v584
    %608 = vmatprep.subr.bf16.mxu0 0
    %609 = vmatpush1.bf16.msra.mxu0 %v585
    %610 = vmatprep.subr.bf16.mxu0 0
    %611 = vmatpush1.bf16.msra.mxu0 0
    %612 = vmatprep.subr.bf16.mxu0 0
    %613 = vmatpush1.bf16.msra.mxu0 0
    %614 = vmatprep.subr.bf16.mxu0 0
    %615 = vmatpush1.bf16.msra.mxu0 0
    %616 = vmatprep.subr.bf16.mxu0 0
    %617 = vmatpush1.bf16.msra.mxu0 0
    %618 = vmatprep.subr.bf16.mxu0 0
    %619 = vmatpush1.bf16.msra.mxu0 0
    %620 = vmatprep.subr.bf16.mxu0 0
    %621 = vmatpush1.bf16.msra.mxu0 0
    %622 = vmatprep.subr.bf16.mxu0 0
    %623 = vmatpush1.bf16.msra.mxu0 0
    %624 = vmatprep.subr.bf16.mxu0 0
    %625 = vmatpush1.bf16.msra.mxu0 0
    %626 = vmatprep.mubr.bf16.mxu0 0
    %627 = vmatmul.mubr.bf16.gmra.mrb[0].mxu0 %v523
    %v628 = vpop.f32.mrb[0].mxu0
    %v629 = vadd.f32 %v545, %v628
    %v630 = vpop.f32.mrb[0].mxu0
    %v631 = vpop.f32.mrb[0].mxu0
    %v632 = vpop.f32.mrb[0].mxu0
    %633 = vdwg.mxu0
    %v634 = vmax.f32 %v629, 0.0
    %v635 = vpack.c.bf16 %v634, %v634
    %636 = vst [vmem:[#allocation2 + $0x10] sm:$0xf] %v635
    %v637 = vld [vmem:[%s0 + $0x14] sm:$0xf]
    %s638 = scalar_lea.vmem [#allocation3], 256
    %v639 = vld [vmem:[%s638] sm:$0xf]
    %v640 = vld [vmem:[%s638 + $0x4] sm:$0xf]
    %v641 = vld [vmem:[%s638 + $0x8] sm:$0xf]
    %v642 = vld [vmem:[%s638 + $0xc] sm:$0xf]
    %v643 = vld [vmem:[%s638 + $0x10] sm:$0xf]
    %v644 = vld [vmem:[%s638 + $0x14] sm:$0xf]
    %v645 = vld [vmem:[%s638 + $0x18] sm:$0xf]
    %v646 = vld [vmem:[%s638 + $0x1c] sm:$0xf]
    %v647 = vld [vmem:[%s638 + $0x20] sm:$0xf]
    %v648 = vld [vmem:[%s638 + $0x24] sm:$0xf]
    %v649 = vld [vmem:[%s638 + $0x28] sm:$0xf]
    %v650 = vld [vmem:[%s638 + $0x2c] sm:$0xf]
    %v651 = vld [vmem:[%s638 + $0x30] sm:$0xf]
    %v652 = vld [vmem:[%s638 + $0x34] sm:$0xf]
    %v653 = vld [vmem:[%s638 + $0x38] sm:$0xf]
    %v654 = vld [vmem:[%s638 + $0x3c] sm:$0xf]
    %v655 = vld [vmem:[%s4 + $0x4] sm:$0x1]
    %v656 = vlaneseq
    %v657 = vshrl.u32 %v656, 7
    %v658 = vsub.s32 0, %v657
    %v659 = vrot.slane %v655, %v658
    %v676 = vunpack.c.l.b16 %v639
    %v677 = vunpack.c.l.b16 %v640
    %v678 = vunpack.c.l.b16 %v641
    %v679 = vunpack.c.l.b16 %v642
    %v680 = vunpack.c.l.b16 %v643
    %v681 = vunpack.c.l.b16 %v644
    %v682 = vunpack.c.l.b16 %v645
    %v683 = vunpack.c.l.b16 %v646
    %v684 = vunpack.c.l.b16 %v647
    %v685 = vunpack.c.l.b16 %v648
    %v686 = vunpack.c.l.b16 %v649
    %v687 = vunpack.c.l.b16 %v650
    %v688 = vunpack.c.l.b16 %v651
    %v689 = vunpack.c.l.b16 %v652
    %v690 = vunpack.c.l.b16 %v653
    %v691 = vunpack.c.l.b16 %v654
    %v692 = vpack.c.b16 %v677, %v676
    %v693 = vpack.c.b16 %v679, %v678
    %v694 = vpack.c.b16 %v681, %v680
    %v695 = vpack.c.b16 %v683, %v682
    %v696 = vpack.c.b16 %v685, %v684
    %v697 = vpack.c.b16 %v687, %v686
    %v698 = vpack.c.b16 %v689, %v688
    %v699 = vpack.c.b16 %v691, %v690
    %708 = vmatprep.subr.bf16.mxu0 0
    %709 = vmatpush1.bf16.msra.mxu0 %v692
    %710 = vmatprep.subr.bf16.mxu0 0
    %711 = vmatpush1.bf16.msra.mxu0 %v693
    %712 = vmatprep.subr.bf16.mxu0 0
    %713 = vmatpush1.bf16.msra.mxu0 %v694
    %714 = vmatprep.subr.bf16.mxu0 0
    %715 = vmatpush1.bf16.msra.mxu0 %v695
    %716 = vmatprep.subr.bf16.mxu0 0
    %717 = vmatpush1.bf16.msra.mxu0 %v696
    %718 = vmatprep.subr.bf16.mxu0 0
    %719 = vmatpush1.bf16.msra.mxu0 %v697
    %720 = vmatprep.subr.bf16.mxu0 0
    %721 = vmatpush1.bf16.msra.mxu0 %v698
    %722 = vmatprep.subr.bf16.mxu0 0
    %723 = vmatpush1.bf16.msra.mxu0 %v699
    %724 = vmatprep.subr.bf16.mxu0 0
    %725 = vmatpush1.bf16.msra.mxu0 0
    %726 = vmatprep.subr.bf16.mxu0 0
    %727 = vmatpush1.bf16.msra.mxu0 0
    %728 = vmatprep.subr.bf16.mxu0 0
    %729 = vmatpush1.bf16.msra.mxu0 0
    %730 = vmatprep.subr.bf16.mxu0 0
    %731 = vmatpush1.bf16.msra.mxu0 0
    %732 = vmatprep.subr.bf16.mxu0 0
    %733 = vmatpush1.bf16.msra.mxu0 0
    %734 = vmatprep.subr.bf16.mxu0 0
    %735 = vmatpush1.bf16.msra.mxu0 0
    %736 = vmatprep.subr.bf16.mxu0 0
    %737 = vmatpush1.bf16.msra.mxu0 0
    %738 = vmatprep.subr.bf16.mxu0 0
    %739 = vmatpush1.bf16.msra.mxu0 0
    %740 = vmatprep.mubr.bf16.mxu0 0
    %741 = vmatmul.mubr.bf16.gmra.mrb[0].mxu0 %v637
    %v742 = vpop.f32.mrb[0].mxu0
    %v743 = vadd.f32 %v659, %v742
    %v744 = vpop.f32.mrb[0].mxu0
    %v745 = vpop.f32.mrb[0].mxu0
    %v746 = vpop.f32.mrb[0].mxu0
    %747 = vdwg.mxu0
    %v748 = vmax.f32 %v743, 0.0
    %v749 = vpack.c.bf16 %v748, %v748
    %750 = vst [vmem:[#allocation2 + $0x14] sm:$0xf] %v749
    %v751 = vld [vmem:[%s0 + $0x18] sm:$0xf]
    %s752 = scalar_lea.vmem [#allocation3], 320
    %v753 = vld [vmem:[%s752] sm:$0xf]
    %v754 = vld [vmem:[%s752 + $0x4] sm:$0xf]
    %v755 = vld [vmem:[%s752 + $0x8] sm:$0xf]
    %v756 = vld [vmem:[%s752 + $0xc] sm:$0xf]
    %v757 = vld [vmem:[%s752 + $0x10] sm:$0xf]
    %v758 = vld [vmem:[%s752 + $0x14] sm:$0xf]
    %v759 = vld [vmem:[%s752 + $0x18] sm:$0xf]
    %v760 = vld [vmem:[%s752 + $0x1c] sm:$0xf]
    %v761 = vld [vmem:[%s752 + $0x20] sm:$0xf]
    %v762 = vld [vmem:[%s752 + $0x24] sm:$0xf]
    %v763 = vld [vmem:[%s752 + $0x28] sm:$0xf]
    %v764 = vld [vmem:[%s752 + $0x2c] sm:$0xf]
    %v765 = vld [vmem:[%s752 + $0x30] sm:$0xf]
    %v766 = vld [vmem:[%s752 + $0x34] sm:$0xf]
    %v767 = vld [vmem:[%s752 + $0x38] sm:$0xf]
    %v768 = vld [vmem:[%s752 + $0x3c] sm:$0xf]
    %v769 = vld [vmem:[%s4 + $0x5] sm:$0x1]
    %v770 = vlaneseq
    %v771 = vshrl.u32 %v770, 7
    %v772 = vsub.s32 0, %v771
    %v773 = vrot.slane %v769, %v772
    %v790 = vunpack.c.l.b16 %v753
    %v791 = vunpack.c.l.b16 %v754
    %v792 = vunpack.c.l.b16 %v755
    %v793 = vunpack.c.l.b16 %v756
    %v794 = vunpack.c.l.b16 %v757
    %v795 = vunpack.c.l.b16 %v758
    %v796 = vunpack.c.l.b16 %v759
    %v797 = vunpack.c.l.b16 %v760
    %v798 = vunpack.c.l.b16 %v761
    %v799 = vunpack.c.l.b16 %v762
    %v800 = vunpack.c.l.b16 %v763
    %v801 = vunpack.c.l.b16 %v764
    %v802 = vunpack.c.l.b16 %v765
    %v803 = vunpack.c.l.b16 %v766
    %v804 = vunpack.c.l.b16 %v767
    %v805 = vunpack.c.l.b16 %v768
    %v806 = vpack.c.b16 %v791, %v790
    %v807 = vpack.c.b16 %v793, %v792
    %v808 = vpack.c.b16 %v795, %v794
    %v809 = vpack.c.b16 %v797, %v796
    %v810 = vpack.c.b16 %v799, %v798
    %v811 = vpack.c.b16 %v801, %v800
    %v812 = vpack.c.b16 %v803, %v802
    %v813 = vpack.c.b16 %v805, %v804
    %822 = vmatprep.subr.bf16.mxu0 0
    %823 = vmatpush1.bf16.msra.mxu0 %v806
    %824 = vmatprep.subr.bf16.mxu0 0
    %825 = vmatpush1.bf16.msra.mxu0 %v807
    %826 = vmatprep.subr.bf16.mxu0 0
    %827 = vmatpush1.bf16.msra.mxu0 %v808
    %828 = vmatprep.subr.bf16.mxu0 0
    %829 = vmatpush1.bf16.msra.mxu0 %v809
    %830 = vmatprep.subr.bf16.mxu0 0
    %831 = vmatpush1.bf16.msra.mxu0 %v810
    %832 = vmatprep.subr.bf16.mxu0 0
    %833 = vmatpush1.bf16.msra.mxu0 %v811
    %834 = vmatprep.subr.bf16.mxu0 0
    %835 = vmatpush1.bf16.msra.mxu0 %v812
    %836 = vmatprep.subr.bf16.mxu0 0
    %837 = vmatpush1.bf16.msra.mxu0 %v813
    %838 = vmatprep.subr.bf16.mxu0 0
    %839 = vmatpush1.bf16.msra.mxu0 0
    %840 = vmatprep.subr.bf16.mxu0 0
    %841 = vmatpush1.bf16.msra.mxu0 0
    %842 = vmatprep.subr.bf16.mxu0 0
    %843 = vmatpush1.bf16.msra.mxu0 0
    %844 = vmatprep.subr.bf16.mxu0 0
    %845 = vmatpush1.bf16.msra.mxu0 0
    %846 = vmatprep.subr.bf16.mxu0 0
    %847 = vmatpush1.bf16.msra.mxu0 0
    %848 = vmatprep.subr.bf16.mxu0 0
    %849 = vmatpush1.bf16.msra.mxu0 0
    %850 = vmatprep.subr.bf16.mxu0 0
    %851 = vmatpush1.bf16.msra.mxu0 0
    %852 = vmatprep.subr.bf16.mxu0 0
    %853 = vmatpush1.bf16.msra.mxu0 0
    %854 = vmatprep.mubr.bf16.mxu0 0
    %855 = vmatmul.mubr.bf16.gmra.mrb[0].mxu0 %v751
    %v856 = vpop.f32.mrb[0].mxu0
    %v857 = vadd.f32 %v773, %v856
    %v858 = vpop.f32.mrb[0].mxu0
    %v859 = vpop.f32.mrb[0].mxu0
    %v860 = vpop.f32.mrb[0].mxu0
    %861 = vdwg.mxu0
    %v862 = vmax.f32 %v857, 0.0
    %v863 = vpack.c.bf16 %v862, %v862
    %864 = vst [vmem:[#allocation2 + $0x18] sm:$0xf] %v863
    %v865 = vld [vmem:[#allocation2] sm:$0xff]
    %v866 = vld [vmem:[#allocation2 + $0x8] sm:$0xff]
    %v867 = vld [vmem:[#allocation2 + $0x10] sm:$0xff]
    %v868 = vld [vmem:[#allocation2 + $0x18] sm:$0xf]
    %v869 = vld [vmem:[#allocation5] sm:$0xff]
    %v870 = vld [vmem:[#allocation5 + $0x8] sm:$0xff]
    %v871 = vld [vmem:[#allocation5 + $0x10] sm:$0xff]
    %v872 = vld [vmem:[#allocation5 + $0x18] sm:$0xff]
    %v873 = vld [vmem:[#allocation5 + $0x20] sm:$0xff]
    %v874 = vld [vmem:[#allocation5 + $0x28] sm:$0xff]
    %v875 = vld [vmem:[#allocation5 + $0x30] sm:$0xff]
    %v876 = vld [vmem:[#allocation5 + $0x38] sm:$0xff]
    %v877 = vld [vmem:[#allocation5 + $0x40] sm:$0xff]
    %v878 = vld [vmem:[#allocation5 + $0x48] sm:$0xff]
    %v879 = vld [vmem:[#allocation5 + $0x50] sm:$0xff]
    %v880 = vld [vmem:[#allocation5 + $0x58] sm:$0xff]
    %v881 = vld [vmem:[#allocation5 + $0x60] sm:$0xff]
    %v882 = vld [vmem:[#allocation5 + $0x68] sm:$0xff]
    %v883 = vld [vmem:[#allocation5 + $0x70] sm:$0xff]
    %v884 = vld [vmem:[#allocation5 + $0x78] sm:$0xff]
    %v885 = vld [vmem:[#allocation5 + $0x80] sm:$0xff]
    %v886 = vld [vmem:[#allocation5 + $0x88] sm:$0xff]
    %v887 = vld [vmem:[#allocation5 + $0x90] sm:$0xff]
    %v888 = vld [vmem:[#allocation5 + $0x98] sm:$0xff]
    %v889 = vld [vmem:[#allocation5 + $0xa0] sm:$0xff]
    %v890 = vld [vmem:[#allocation5 + $0xa8] sm:$0xff]
    %v891 = vld [vmem:[#allocation5 + $0xb0] sm:$0xff]
    %v892 = vld [vmem:[#allocation5 + $0xb8] sm:$0xff]
    %v893 = vld [vmem:[#allocation5 + $0xc0] sm:$0xff]
    %v894 = vld [vmem:[#allocation5 + $0xc8] sm:$0xff]
    %v895 = vld [vmem:[#allocation5 + $0xd0] sm:$0xff]
    %v896 = vld [vmem:[#allocation5 + $0xd8] sm:$0xff]
    %v897 = vld [vmem:[#allocation5 + $0xe0] sm:$0xff]
    %v898 = vld [vmem:[#allocation5 + $0xe8] sm:$0xff]
    %v899 = vld [vmem:[#allocation5 + $0xf0] sm:$0xff]
    %v900 = vld [vmem:[#allocation5 + $0xf8] sm:$0xff]
    %v901 = vld [vmem:[#allocation5 + $0x100] sm:$0xff]
    %v902 = vld [vmem:[#allocation5 + $0x108] sm:$0xff]
    %v903 = vld [vmem:[#allocation5 + $0x110] sm:$0xff]
    %v904 = vld [vmem:[#allocation5 + $0x118] sm:$0xff]
    %v905 = vld [vmem:[#allocation5 + $0x120] sm:$0xff]
    %v906 = vld [vmem:[#allocation5 + $0x128] sm:$0xff]
    %v907 = vld [vmem:[#allocation5 + $0x130] sm:$0xff]
    %v908 = vld [vmem:[#allocation5 + $0x138] sm:$0xff]
    %v909 = vld [vmem:[#allocation5 + $0x140] sm:$0xff]
    %v910 = vld [vmem:[#allocation5 + $0x148] sm:$0xff]
    %v911 = vld [vmem:[#allocation5 + $0x150] sm:$0xff]
    %v912 = vld [vmem:[#allocation5 + $0x158] sm:$0xff]
    %v913 = vld [vmem:[#allocation5 + $0x160] sm:$0xff]
    %v914 = vld [vmem:[#allocation5 + $0x168] sm:$0xff]
    %v915 = vld [vmem:[#allocation5 + $0x170] sm:$0xff]
    %v916 = vld [vmem:[#allocation5 + $0x178] sm:$0xff]
    %v917 = vld [vmem:[#allocation5 + $0x180] sm:$0xff]
    %v918 = vld [vmem:[#allocation5 + $0x188] sm:$0xff]
    %v919 = vld [vmem:[#allocation5 + $0x190] sm:$0xff]
    %v920 = vld [vmem:[#allocation5 + $0x198] sm:$0xff]
    %v921 = vld [vmem:[#allocation5 + $0x1a0] sm:$0xff]
    %v922 = vld [vmem:[#allocation5 + $0x1a8] sm:$0xff]
    %v923 = vld [vmem:[#allocation5 + $0x1b0] sm:$0xff]
    %v924 = vld [vmem:[#allocation5 + $0x1b8] sm:$0xff]
    %v925 = vld [vmem:[#allocation5 + $0x1c0] sm:$0xff]
    %v926 = vld [vmem:[#allocation5 + $0x1c8] sm:$0xff]
    %v927 = vld [vmem:[#allocation5 + $0x1d0] sm:$0xff]
    %v928 = vld [vmem:[#allocation5 + $0x1d8] sm:$0xff]
    %v929 = vld [vmem:[#allocation5 + $0x1e0] sm:$0xff]
    %v930 = vld [vmem:[#allocation5 + $0x1e8] sm:$0xff]
    %v931 = vld [vmem:[#allocation5 + $0x1f0] sm:$0xff]
    %v932 = vld [vmem:[#allocation5 + $0x1f8] sm:$0xff]
    %v933 = vld [vmem:[#allocation5 + $0x200] sm:$0xff]
    %v934 = vld [vmem:[#allocation5 + $0x208] sm:$0xff]
    %v935 = vld [vmem:[#allocation5 + $0x210] sm:$0xff]
    %v936 = vld [vmem:[#allocation5 + $0x218] sm:$0xff]
    %v937 = vld [vmem:[#allocation5 + $0x220] sm:$0xff]
    %v938 = vld [vmem:[#allocation5 + $0x228] sm:$0xff]
    %v939 = vld [vmem:[#allocation5 + $0x230] sm:$0xff]
    %v940 = vld [vmem:[#allocation5 + $0x238] sm:$0xff]
    %v941 = vld [vmem:[#allocation5 + $0x240] sm:$0xff]
    %v942 = vld [vmem:[#allocation5 + $0x248] sm:$0xff]
    %v943 = vld [vmem:[#allocation5 + $0x250] sm:$0xff]
    %v944 = vld [vmem:[#allocation5 + $0x258] sm:$0xff]
    %v945 = vld [vmem:[#allocation5 + $0x260] sm:$0xff]
    %v946 = vld [vmem:[#allocation5 + $0x268] sm:$0xff]
    %v947 = vld [vmem:[#allocation5 + $0x270] sm:$0xff]
    %v948 = vld [vmem:[#allocation5 + $0x278] sm:$0xff]
    %v949 = vld [vmem:[#allocation5 + $0x280] sm:$0xff]
    %v950 = vld [vmem:[#allocation5 + $0x288] sm:$0xff]
    %v951 = vld [vmem:[#allocation5 + $0x290] sm:$0xff]
    %v952 = vld [vmem:[#allocation5 + $0x298] sm:$0xff]
    %v953 = vld [vmem:[#allocation5 + $0x2a0] sm:$0xff]
    %v954 = vld [vmem:[#allocation5 + $0x2a8] sm:$0xff]
    %v955 = vld [vmem:[#allocation5 + $0x2b0] sm:$0xff]
    %v956 = vld [vmem:[#allocation5 + $0x2b8] sm:$0xff]
    %v957 = vld [vmem:[#allocation5 + $0x2c0] sm:$0xff]
    %v958 = vld [vmem:[#allocation5 + $0x2c8] sm:$0xff]
    %v959 = vld [vmem:[#allocation5 + $0x2d0] sm:$0xff]
    %v960 = vld [vmem:[#allocation5 + $0x2d8] sm:$0xff]
    %v961 = vld [vmem:[#allocation5 + $0x2e0] sm:$0xff]
    %v962 = vld [vmem:[#allocation5 + $0x2e8] sm:$0xff]
    %v963 = vld [vmem:[#allocation5 + $0x2f0] sm:$0xff]
    %v964 = vld [vmem:[#allocation5 + $0x2f8] sm:$0xff]
    %v965 = vld [vmem:[#allocation5 + $0x300] sm:$0xff]
    %v966 = vld [vmem:[#allocation5 + $0x308] sm:$0xff]
    %v967 = vld [vmem:[#allocation5 + $0x310] sm:$0xff]
    %v968 = vld [vmem:[#allocation5 + $0x318] sm:$0xff]
    %v969 = vld [vmem:[#allocation5 + $0x320] sm:$0xff]
    %v970 = vld [vmem:[#allocation5 + $0x328] sm:$0xff]
    %v971 = vld [vmem:[#allocation5 + $0x330] sm:$0xff]
    %v972 = vld [vmem:[#allocation5 + $0x338] sm:$0xff]
    %v973 = vld [vmem:[#allocation5 + $0x340] sm:$0xff]
    %v974 = vld [vmem:[#allocation5 + $0x348] sm:$0xff]
    %v975 = vld [vmem:[#allocation5 + $0x350] sm:$0xff]
    %v976 = vld [vmem:[#allocation5 + $0x358] sm:$0xff]
    %v977 = vld [vmem:[#allocation5 + $0x360] sm:$0xff]
    %v978 = vld [vmem:[#allocation5 + $0x368] sm:$0xff]
    %v979 = vld [vmem:[#allocation5 + $0x370] sm:$0xff]
    %v980 = vld [vmem:[#allocation5 + $0x378] sm:$0xff]
    %v981 = vld [vmem:[%s6] sm:$0x3]
    %v983 = vlaneseq
    %v984 = vshrl.u32 %v983, 7
    %v985 = vsub.s32 0, %v984
    %v986 = vrot.slane %v981, %v985
    %v987 = vlaneseq
    %v988 = vshrl.u32 %v987, 7
    %v989 = vsub.s32 1, %v988
    %v990 = vrot.slane %v981, %v989
    %v997 = vunpack.c.l.b16 %v865
    %v998 = vunpack.c.h.b16 %v865
    %v999 = vunpack.c.l.b16 %v866
    %v1000 = vunpack.c.h.b16 %v866
    %v1001 = vunpack.c.l.b16 %v867
    %v1002 = vunpack.c.h.b16 %v867
    %v1003 = vunpack.c.l.b16 %v868
    %v1004 = vpack.c.b16 %v997, %v997
    %v1005 = vpack.c.b16 %v998, %v998
    %v1006 = vpack.c.b16 %v999, %v999
    %v1007 = vpack.c.b16 %v1000, %v1000
    %v1008 = vpack.c.b16 %v1001, %v1001
    %v1009 = vpack.c.b16 %v1002, %v1002
    %v1010 = vpack.c.b16 %v1003, %v1003
    %v1130 = vunpack.c.l.b16 %v869
    %v1131 = vunpack.c.h.b16 %v869
    %v1132 = vunpack.c.l.b16 %v870
    %v1133 = vunpack.c.h.b16 %v870
    %v1134 = vunpack.c.l.b16 %v871
    %v1135 = vunpack.c.h.b16 %v871
    %v1136 = vunpack.c.l.b16 %v872
    %v1137 = vunpack.c.h.b16 %v872
    %v1138 = vunpack.c.l.b16 %v873
    %v1139 = vunpack.c.h.b16 %v873
    %v1140 = vunpack.c.l.b16 %v874
    %v1141 = vunpack.c.h.b16 %v874
    %v1142 = vunpack.c.l.b16 %v875
    %v1143 = vunpack.c.h.b16 %v875
    %v1144 = vunpack.c.l.b16 %v876
    %v1145 = vunpack.c.h.b16 %v876
    %v1146 = vunpack.c.l.b16 %v877
    %v1147 = vunpack.c.h.b16 %v877
    %v1148 = vunpack.c.l.b16 %v878
    %v1149 = vunpack.c.h.b16 %v878
    %v1150 = vunpack.c.l.b16 %v879
    %v1151 = vunpack.c.h.b16 %v879
    %v1152 = vunpack.c.l.b16 %v880
    %v1153 = vunpack.c.h.b16 %v880
    %v1154 = vunpack.c.l.b16 %v881
    %v1155 = vunpack.c.h.b16 %v881
    %v1156 = vunpack.c.l.b16 %v882
    %v1157 = vunpack.c.h.b16 %v882
    %v1158 = vunpack.c.l.b16 %v883
    %v1159 = vunpack.c.h.b16 %v883
    %v1160 = vunpack.c.l.b16 %v884
    %v1161 = vunpack.c.h.b16 %v884
    %v1162 = vunpack.c.l.b16 %v885
    %v1163 = vunpack.c.h.b16 %v885
    %v1164 = vunpack.c.l.b16 %v886
    %v1165 = vunpack.c.h.b16 %v886
    %v1166 = vunpack.c.l.b16 %v887
    %v1167 = vunpack.c.h.b16 %v887
    %v1168 = vunpack.c.l.b16 %v888
    %v1169 = vunpack.c.h.b16 %v888
    %v1170 = vunpack.c.l.b16 %v889
    %v1171 = vunpack.c.h.b16 %v889
    %v1172 = vunpack.c.l.b16 %v890
    %v1173 = vunpack.c.h.b16 %v890
    %v1174 = vunpack.c.l.b16 %v891
    %v1175 = vunpack.c.h.b16 %v891
    %v1176 = vunpack.c.l.b16 %v892
    %v1177 = vunpack.c.h.b16 %v892
    %v1178 = vunpack.c.l.b16 %v893
    %v1179 = vunpack.c.h.b16 %v893
    %v1180 = vunpack.c.l.b16 %v894
    %v1181 = vunpack.c.h.b16 %v894
    %v1182 = vunpack.c.l.b16 %v895
    %v1183 = vunpack.c.h.b16 %v895
    %v1184 = vunpack.c.l.b16 %v896
    %v1185 = vunpack.c.h.b16 %v896
    %v1186 = vunpack.c.l.b16 %v897
    %v1187 = vunpack.c.h.b16 %v897
    %v1188 = vunpack.c.l.b16 %v898
    %v1189 = vunpack.c.h.b16 %v898
    %v1190 = vunpack.c.l.b16 %v899
    %v1191 = vunpack.c.h.b16 %v899
    %v1192 = vunpack.c.l.b16 %v900
    %v1193 = vunpack.c.h.b16 %v900
    %v1194 = vunpack.c.l.b16 %v901
    %v1195 = vunpack.c.h.b16 %v901
    %v1196 = vunpack.c.l.b16 %v902
    %v1197 = vunpack.c.h.b16 %v902
    %v1198 = vunpack.c.l.b16 %v903
    %v1199 = vunpack.c.h.b16 %v903
    %v1200 = vunpack.c.l.b16 %v904
    %v1201 = vunpack.c.h.b16 %v904
    %v1202 = vunpack.c.l.b16 %v905
    %v1203 = vunpack.c.h.b16 %v905
    %v1204 = vunpack.c.l.b16 %v906
    %v1205 = vunpack.c.h.b16 %v906
    %v1206 = vunpack.c.l.b16 %v907
    %v1207 = vunpack.c.h.b16 %v907
    %v1208 = vunpack.c.l.b16 %v908
    %v1209 = vunpack.c.h.b16 %v908
    %v1210 = vunpack.c.l.b16 %v909
    %v1211 = vunpack.c.h.b16 %v909
    %v1212 = vunpack.c.l.b16 %v910
    %v1213 = vunpack.c.h.b16 %v910
    %v1214 = vunpack.c.l.b16 %v911
    %v1215 = vunpack.c.h.b16 %v911
    %v1216 = vunpack.c.l.b16 %v912
    %v1217 = vunpack.c.h.b16 %v912
    %v1218 = vunpack.c.l.b16 %v913
    %v1219 = vunpack.c.h.b16 %v913
    %v1220 = vunpack.c.l.b16 %v914
    %v1221 = vunpack.c.h.b16 %v914
    %v1222 = vunpack.c.l.b16 %v915
    %v1223 = vunpack.c.h.b16 %v915
    %v1224 = vunpack.c.l.b16 %v916
    %v1225 = vunpack.c.h.b16 %v916
    %v1226 = vunpack.c.l.b16 %v917
    %v1227 = vunpack.c.h.b16 %v917
    %v1228 = vunpack.c.l.b16 %v918
    %v1229 = vunpack.c.h.b16 %v918
    %v1230 = vunpack.c.l.b16 %v919
    %v1231 = vunpack.c.h.b16 %v919
    %v1232 = vunpack.c.l.b16 %v920
    %v1233 = vunpack.c.h.b16 %v920
    %v1234 = vunpack.c.l.b16 %v921
    %v1235 = vunpack.c.h.b16 %v921
    %v1236 = vunpack.c.l.b16 %v922
    %v1237 = vunpack.c.h.b16 %v922
    %v1238 = vunpack.c.l.b16 %v923
    %v1239 = vunpack.c.h.b16 %v923
    %v1240 = vunpack.c.l.b16 %v924
    %v1241 = vunpack.c.h.b16 %v924
    %v1242 = vunpack.c.l.b16 %v925
    %v1243 = vunpack.c.h.b16 %v925
    %v1244 = vunpack.c.l.b16 %v926
    %v1245 = vunpack.c.h.b16 %v926
    %v1246 = vunpack.c.l.b16 %v927
    %v1247 = vunpack.c.h.b16 %v927
    %v1248 = vunpack.c.l.b16 %v928
    %v1249 = vunpack.c.h.b16 %v928
    %v1250 = vunpack.c.l.b16 %v929
    %v1251 = vunpack.c.h.b16 %v929
    %v1252 = vunpack.c.l.b16 %v930
    %v1253 = vunpack.c.h.b16 %v930
    %v1254 = vunpack.c.l.b16 %v931
    %v1255 = vunpack.c.h.b16 %v931
    %v1256 = vunpack.c.l.b16 %v932
    %v1257 = vunpack.c.h.b16 %v932
    %v1258 = vunpack.c.l.b16 %v933
    %v1259 = vunpack.c.h.b16 %v933
    %v1260 = vunpack.c.l.b16 %v934
    %v1261 = vunpack.c.h.b16 %v934
    %v1262 = vunpack.c.l.b16 %v935
    %v1263 = vunpack.c.h.b16 %v935
    %v1264 = vunpack.c.l.b16 %v936
    %v1265 = vunpack.c.h.b16 %v936
    %v1266 = vunpack.c.l.b16 %v937
    %v1267 = vunpack.c.h.b16 %v937
    %v1268 = vunpack.c.l.b16 %v938
    %v1269 = vunpack.c.h.b16 %v938
    %v1270 = vunpack.c.l.b16 %v939
    %v1271 = vunpack.c.h.b16 %v939
    %v1272 = vunpack.c.l.b16 %v940
    %v1273 = vunpack.c.h.b16 %v940
    %v1274 = vunpack.c.l.b16 %v941
    %v1275 = vunpack.c.h.b16 %v941
    %v1276 = vunpack.c.l.b16 %v942
    %v1277 = vunpack.c.h.b16 %v942
    %v1278 = vunpack.c.l.b16 %v943
    %v1279 = vunpack.c.h.b16 %v943
    %v1280 = vunpack.c.l.b16 %v944
    %v1281 = vunpack.c.h.b16 %v944
    %v1282 = vunpack.c.l.b16 %v945
    %v1283 = vunpack.c.h.b16 %v945
    %v1284 = vunpack.c.l.b16 %v946
    %v1285 = vunpack.c.h.b16 %v946
    %v1286 = vunpack.c.l.b16 %v947
    %v1287 = vunpack.c.h.b16 %v947
    %v1288 = vunpack.c.l.b16 %v948
    %v1289 = vunpack.c.h.b16 %v948
    %v1290 = vunpack.c.l.b16 %v949
    %v1291 = vunpack.c.h.b16 %v949
    %v1292 = vunpack.c.l.b16 %v950
    %v1293 = vunpack.c.h.b16 %v950
    %v1294 = vunpack.c.l.b16 %v951
    %v1295 = vunpack.c.h.b16 %v951
    %v1296 = vunpack.c.l.b16 %v952
    %v1297 = vunpack.c.h.b16 %v952
    %v1298 = vunpack.c.l.b16 %v953
    %v1299 = vunpack.c.h.b16 %v953
    %v1300 = vunpack.c.l.b16 %v954
    %v1301 = vunpack.c.h.b16 %v954
    %v1302 = vunpack.c.l.b16 %v955
    %v1303 = vunpack.c.h.b16 %v955
    %v1304 = vunpack.c.l.b16 %v956
    %v1305 = vunpack.c.h.b16 %v956
    %v1306 = vunpack.c.l.b16 %v957
    %v1307 = vunpack.c.h.b16 %v957
    %v1308 = vunpack.c.l.b16 %v958
    %v1309 = vunpack.c.h.b16 %v958
    %v1310 = vunpack.c.l.b16 %v959
    %v1311 = vunpack.c.h.b16 %v959
    %v1312 = vunpack.c.l.b16 %v960
    %v1313 = vunpack.c.h.b16 %v960
    %v1314 = vunpack.c.l.b16 %v961
    %v1315 = vunpack.c.h.b16 %v961
    %v1316 = vunpack.c.l.b16 %v962
    %v1317 = vunpack.c.h.b16 %v962
    %v1318 = vunpack.c.l.b16 %v963
    %v1319 = vunpack.c.h.b16 %v963
    %v1320 = vunpack.c.l.b16 %v964
    %v1321 = vunpack.c.h.b16 %v964
    %v1322 = vunpack.c.l.b16 %v965
    %v1323 = vunpack.c.h.b16 %v965
    %v1324 = vunpack.c.l.b16 %v966
    %v1325 = vunpack.c.h.b16 %v966
    %v1326 = vunpack.c.l.b16 %v967
    %v1327 = vunpack.c.h.b16 %v967
    %v1328 = vunpack.c.l.b16 %v968
    %v1329 = vunpack.c.h.b16 %v968
    %v1330 = vunpack.c.l.b16 %v969
    %v1331 = vunpack.c.h.b16 %v969
    %v1332 = vunpack.c.l.b16 %v970
    %v1333 = vunpack.c.h.b16 %v970
    %v1334 = vunpack.c.l.b16 %v971
    %v1335 = vunpack.c.h.b16 %v971
    %v1336 = vunpack.c.l.b16 %v972
    %v1337 = vunpack.c.h.b16 %v972
    %v1338 = vunpack.c.l.b16 %v973
    %v1339 = vunpack.c.h.b16 %v973
    %v1340 = vunpack.c.l.b16 %v974
    %v1341 = vunpack.c.h.b16 %v974
    %v1342 = vunpack.c.l.b16 %v975
    %v1343 = vunpack.c.h.b16 %v975
    %v1344 = vunpack.c.l.b16 %v976
    %v1345 = vunpack.c.h.b16 %v976
    %v1346 = vunpack.c.l.b16 %v977
    %v1347 = vunpack.c.h.b16 %v977
    %v1348 = vunpack.c.l.b16 %v978
    %v1349 = vunpack.c.h.b16 %v978
    %v1350 = vunpack.c.l.b16 %v979
    %v1351 = vunpack.c.h.b16 %v979
    %v1352 = vunpack.c.l.b16 %v980
    %v1353 = vunpack.c.h.b16 %v980
    %v1354 = vpack.c.b16 %v1132, %v1130
    %v1355 = vpack.c.b16 %v1133, %v1131
    %v1356 = vpack.c.b16 %v1136, %v1134
    %v1357 = vpack.c.b16 %v1137, %v1135
    %v1358 = vpack.c.b16 %v1140, %v1138
    %v1359 = vpack.c.b16 %v1141, %v1139
    %v1360 = vpack.c.b16 %v1144, %v1142
    %v1361 = vpack.c.b16 %v1145, %v1143
    %v1362 = vpack.c.b16 %v1148, %v1146
    %v1363 = vpack.c.b16 %v1149, %v1147
    %v1364 = vpack.c.b16 %v1152, %v1150
    %v1365 = vpack.c.b16 %v1153, %v1151
    %v1366 = vpack.c.b16 %v1156, %v1154
    %v1367 = vpack.c.b16 %v1157, %v1155
    %v1368 = vpack.c.b16 %v1160, %v1158
    %v1369 = vpack.c.b16 %v1161, %v1159
    %v1370 = vpack.c.b16 %v1164, %v1162
    %v1371 = vpack.c.b16 %v1165, %v1163
    %v1372 = vpack.c.b16 %v1168, %v1166
    %v1373 = vpack.c.b16 %v1169, %v1167
    %v1374 = vpack.c.b16 %v1172, %v1170
    %v1375 = vpack.c.b16 %v1173, %v1171
    %v1376 = vpack.c.b16 %v1176, %v1174
    %v1377 = vpack.c.b16 %v1177, %v1175
    %v1378 = vpack.c.b16 %v1180, %v1178
    %v1379 = vpack.c.b16 %v1181, %v1179
    %v1380 = vpack.c.b16 %v1184, %v1182
    %v1381 = vpack.c.b16 %v1185, %v1183
    %v1382 = vpack.c.b16 %v1188, %v1186
    %v1383 = vpack.c.b16 %v1189, %v1187
    %v1384 = vpack.c.b16 %v1192, %v1190
    %v1385 = vpack.c.b16 %v1193, %v1191
    %v1386 = vpack.c.b16 %v1196, %v1194
    %v1387 = vpack.c.b16 %v1197, %v1195
    %v1388 = vpack.c.b16 %v1200, %v1198
    %v1389 = vpack.c.b16 %v1201, %v1199
    %v1390 = vpack.c.b16 %v1204, %v1202
    %v1391 = vpack.c.b16 %v1205, %v1203
    %v1392 = vpack.c.b16 %v1208, %v1206
    %v1393 = vpack.c.b16 %v1209, %v1207
    %v1394 = vpack.c.b16 %v1212, %v1210
    %v1395 = vpack.c.b16 %v1213, %v1211
    %v1396 = vpack.c.b16 %v1216, %v1214
    %v1397 = vpack.c.b16 %v1217, %v1215
    %v1398 = vpack.c.b16 %v1220, %v1218
    %v1399 = vpack.c.b16 %v1221, %v1219
    %v1400 = vpack.c.b16 %v1224, %v1222
    %v1401 = vpack.c.b16 %v1225, %v1223
    %v1402 = vpack.c.b16 %v1228, %v1226
    %v1403 = vpack.c.b16 %v1229, %v1227
    %v1404 = vpack.c.b16 %v1232, %v1230
    %v1405 = vpack.c.b16 %v1233, %v1231
    %v1406 = vpack.c.b16 %v1236, %v1234
    %v1407 = vpack.c.b16 %v1237, %v1235
    %v1408 = vpack.c.b16 %v1240, %v1238
    %v1409 = vpack.c.b16 %v1241, %v1239
    %v1410 = vpack.c.b16 %v1244, %v1242
    %v1411 = vpack.c.b16 %v1245, %v1243
    %v1412 = vpack.c.b16 %v1248, %v1246
    %v1413 = vpack.c.b16 %v1249, %v1247
    %v1414 = vpack.c.b16 %v1252, %v1250
    %v1415 = vpack.c.b16 %v1253, %v1251
    %v1416 = vpack.c.b16 %v1256, %v1254
    %v1417 = vpack.c.b16 %v1257, %v1255
    %v1418 = vpack.c.b16 %v1260, %v1258
    %v1419 = vpack.c.b16 %v1261, %v1259
    %v1420 = vpack.c.b16 %v1264, %v1262
    %v1421 = vpack.c.b16 %v1265, %v1263
    %v1422 = vpack.c.b16 %v1268, %v1266
    %v1423 = vpack.c.b16 %v1269, %v1267
    %v1424 = vpack.c.b16 %v1272, %v1270
    %v1425 = vpack.c.b16 %v1273, %v1271
    %v1426 = vpack.c.b16 %v1276, %v1274
    %v1427 = vpack.c.b16 %v1277, %v1275
    %v1428 = vpack.c.b16 %v1280, %v1278
    %v1429 = vpack.c.b16 %v1281, %v1279
    %v1430 = vpack.c.b16 %v1284, %v1282
    %v1431 = vpack.c.b16 %v1285, %v1283
    %v1432 = vpack.c.b16 %v1288, %v1286
    %v1433 = vpack.c.b16 %v1289, %v1287
    %v1434 = vpack.c.b16 %v1292, %v1290
    %v1435 = vpack.c.b16 %v1293, %v1291
    %v1436 = vpack.c.b16 %v1296, %v1294
    %v1437 = vpack.c.b16 %v1297, %v1295
    %v1438 = vpack.c.b16 %v1300, %v1298
    %v1439 = vpack.c.b16 %v1301, %v1299
    %v1440 = vpack.c.b16 %v1304, %v1302
    %v1441 = vpack.c.b16 %v1305, %v1303
    %v1442 = vpack.c.b16 %v1308, %v1306
    %v1443 = vpack.c.b16 %v1309, %v1307
    %v1444 = vpack.c.b16 %v1312, %v1310
    %v1445 = vpack.c.b16 %v1313, %v1311
    %v1446 = vpack.c.b16 %v1316, %v1314
    %v1447 = vpack.c.b16 %v1317, %v1315
    %v1448 = vpack.c.b16 %v1320, %v1318
    %v1449 = vpack.c.b16 %v1321, %v1319
    %v1450 = vpack.c.b16 %v1324, %v1322
    %v1451 = vpack.c.b16 %v1325, %v1323
    %v1452 = vpack.c.b16 %v1328, %v1326
    %v1453 = vpack.c.b16 %v1329, %v1327
    %v1454 = vpack.c.b16 %v1332, %v1330
    %v1455 = vpack.c.b16 %v1333, %v1331
    %v1456 = vpack.c.b16 %v1336, %v1334
    %v1457 = vpack.c.b16 %v1337, %v1335
    %v1458 = vpack.c.b16 %v1340, %v1338
    %v1459 = vpack.c.b16 %v1341, %v1339
    %v1460 = vpack.c.b16 %v1344, %v1342
    %v1461 = vpack.c.b16 %v1345, %v1343
    %v1462 = vpack.c.b16 %v1348, %v1346
    %v1463 = vpack.c.b16 %v1349, %v1347
    %v1464 = vpack.c.b16 %v1352, %v1350
    %v1465 = vpack.c.b16 %v1353, %v1351
    %1578 = vmatprep.subr.bf16.mxu0 %v1355
    %1579 = vmatpush1.bf16.msra.mxu0 %v1354
    %1580 = vmatprep.subr.bf16.mxu0 %v1357
    %1581 = vmatpush1.bf16.msra.mxu0 %v1356
    %1582 = vmatprep.subr.bf16.mxu0 %v1359
    %1583 = vmatpush1.bf16.msra.mxu0 %v1358
    %1584 = vmatprep.subr.bf16.mxu0 %v1361
    %1585 = vmatpush1.bf16.msra.mxu0 %v1360
    %1586 = vmatprep.subr.bf16.mxu0 %v1363
    %1587 = vmatpush1.bf16.msra.mxu0 %v1362
    %1588 = vmatprep.subr.bf16.mxu0 %v1365
    %1589 = vmatpush1.bf16.msra.mxu0 %v1364
    %1590 = vmatprep.subr.bf16.mxu0 %v1367
    %1591 = vmatpush1.bf16.msra.mxu0 %v1366
    %1592 = vmatprep.subr.bf16.mxu0 %v1369
    %1593 = vmatpush1.bf16.msra.mxu0 %v1368
    %1594 = vmatprep.subr.bf16.mxu0 %v1371
    %1595 = vmatpush1.bf16.msra.mxu0 %v1370
    %1596 = vmatprep.subr.bf16.mxu0 %v1373
    %1597 = vmatpush1.bf16.msra.mxu0 %v1372
    %1598 = vmatprep.subr.bf16.mxu0 %v1375
    %1599 = vmatpush1.bf16.msra.mxu0 %v1374
    %1600 = vmatprep.subr.bf16.mxu0 %v1377
    %1601 = vmatpush1.bf16.msra.mxu0 %v1376
    %1602 = vmatprep.subr.bf16.mxu0 %v1379
    %1603 = vmatpush1.bf16.msra.mxu0 %v1378
    %1604 = vmatprep.subr.bf16.mxu0 %v1381
    %1605 = vmatpush1.bf16.msra.mxu0 %v1380
    %1606 = vmatprep.subr.bf16.mxu0 %v1383
    %1607 = vmatpush1.bf16.msra.mxu0 %v1382
    %1608 = vmatprep.subr.bf16.mxu0 %v1385
    %1609 = vmatpush1.bf16.msra.mxu0 %v1384
    %1610 = vmatprep.mubr.bf16.mxu0 %v1005
    %1611 = vmatmul.mubr.bf16.gmra.mrb[0].mxu0 %v1004
    %v1612 = vpop.f32.mrb[0].mxu0
    %v1613 = vadd.f32 %v986, %v1612
    %v1614 = vpop.f32.mrb[0].mxu0
    %v1615 = vadd.f32 %v990, %v1614
    %v1616 = vpop.f32.mrb[0].mxu0
    %v1617 = vpop.f32.mrb[0].mxu0
    %1618 = vdwg.mxu0
    %1619 = vmatprep.subr.bf16.mxu0 %v1387
    %1620 = vmatpush1.bf16.msra.mxu0 %v1386
    %1621 = vmatprep.subr.bf16.mxu0 %v1389
    %1622 = vmatpush1.bf16.msra.mxu0 %v1388
    %1623 = vmatprep.subr.bf16.mxu0 %v1391
    %1624 = vmatpush1.bf16.msra.mxu0 %v1390
    %1625 = vmatprep.subr.bf16.mxu0 %v1393
    %1626 = vmatpush1.bf16.msra.mxu0 %v1392
    %1627 = vmatprep.subr.bf16.mxu0 %v1395
    %1628 = vmatpush1.bf16.msra.mxu0 %v1394
    %1629 = vmatprep.subr.bf16.mxu0 %v1397
    %1630 = vmatpush1.bf16.msra.mxu0 %v1396
    %1631 = vmatprep.subr.bf16.mxu0 %v1399
    %1632 = vmatpush1.bf16.msra.mxu0 %v1398
    %1633 = vmatprep.subr.bf16.mxu0 %v1401
    %1634 = vmatpush1.bf16.msra.mxu0 %v1400
    %1635 = vmatprep.subr.bf16.mxu0 %v1403
    %1636 = vmatpush1.bf16.msra.mxu0 %v1402
    %1637 = vmatprep.subr.bf16.mxu0 %v1405
    %1638 = vmatpush1.bf16.msra.mxu0 %v1404
    %1639 = vmatprep.subr.bf16.mxu0 %v1407
    %1640 = vmatpush1.bf16.msra.mxu0 %v1406
    %1641 = vmatprep.subr.bf16.mxu0 %v1409
    %1642 = vmatpush1.bf16.msra.mxu0 %v1408
    %1643 = vmatprep.subr.bf16.mxu0 %v1411
    %1644 = vmatpush1.bf16.msra.mxu0 %v1410
    %1645 = vmatprep.subr.bf16.mxu0 %v1413
    %1646 = vmatpush1.bf16.msra.mxu0 %v1412
    %1647 = vmatprep.subr.bf16.mxu0 %v1415
    %1648 = vmatpush1.bf16.msra.mxu0 %v1414
    %1649 = vmatprep.subr.bf16.mxu0 %v1417
    %1650 = vmatpush1.bf16.msra.mxu0 %v1416
    %1651 = vmatprep.mubr.bf16.mxu0 %v1007
    %1652 = vmatmul.mubr.bf16.gmra.mrb[0].mxu0 %v1006
    %v1653 = vpop.f32.mrb[0].mxu0
    %v1654 = vadd.f32 %v1613, %v1653
    %v1655 = vpop.f32.mrb[0].mxu0
    %v1656 = vadd.f32 %v1615, %v1655
    %v1657 = vpop.f32.mrb[0].mxu0
    %v1658 = vpop.f32.mrb[0].mxu0
    %1659 = vdwg.mxu0
    %1660 = vmatprep.subr.bf16.mxu0 %v1419
    %1661 = vmatpush1.bf16.msra.mxu0 %v1418
    %1662 = vmatprep.subr.bf16.mxu0 %v1421
    %1663 = vmatpush1.bf16.msra.mxu0 %v1420
    %1664 = vmatprep.subr.bf16.mxu0 %v1423
    %1665 = vmatpush1.bf16.msra.mxu0 %v1422
    %1666 = vmatprep.subr.bf16.mxu0 %v1425
    %1667 = vmatpush1.bf16.msra.mxu0 %v1424
    %1668 = vmatprep.subr.bf16.mxu0 %v1427
    %1669 = vmatpush1.bf16.msra.mxu0 %v1426
    %1670 = vmatprep.subr.bf16.mxu0 %v1429
    %1671 = vmatpush1.bf16.msra.mxu0 %v1428
    %1672 = vmatprep.subr.bf16.mxu0 %v1431
    %1673 = vmatpush1.bf16.msra.mxu0 %v1430
    %1674 = vmatprep.subr.bf16.mxu0 %v1433
    %1675 = vmatpush1.bf16.msra.mxu0 %v1432
    %1676 = vmatprep.subr.bf16.mxu0 %v1435
    %1677 = vmatpush1.bf16.msra.mxu0 %v1434
    %1678 = vmatprep.subr.bf16.mxu0 %v1437
    %1679 = vmatpush1.bf16.msra.mxu0 %v1436
    %1680 = vmatprep.subr.bf16.mxu0 %v1439
    %1681 = vmatpush1.bf16.msra.mxu0 %v1438
    %1682 = vmatprep.subr.bf16.mxu0 %v1441
    %1683 = vmatpush1.bf16.msra.mxu0 %v1440
    %1684 = vmatprep.subr.bf16.mxu0 %v1443
    %1685 = vmatpush1.bf16.msra.mxu0 %v1442
    %1686 = vmatprep.subr.bf16.mxu0 %v1445
    %1687 = vmatpush1.bf16.msra.mxu0 %v1444
    %1688 = vmatprep.subr.bf16.mxu0 %v1447
    %1689 = vmatpush1.bf16.msra.mxu0 %v1446
    %1690 = vmatprep.subr.bf16.mxu0 %v1449
    %1691 = vmatpush1.bf16.msra.mxu0 %v1448
    %1692 = vmatprep.mubr.bf16.mxu0 %v1009
    %1693 = vmatmul.mubr.bf16.gmra.mrb[0].mxu0 %v1008
    %v1694 = vpop.f32.mrb[0].mxu0
    %v1695 = vadd.f32 %v1654, %v1694
    %v1696 = vpop.f32.mrb[0].mxu0
    %v1697 = vadd.f32 %v1656, %v1696
    %v1698 = vpop.f32.mrb[0].mxu0
    %v1699 = vpop.f32.mrb[0].mxu0
    %1700 = vdwg.mxu0
    %1701 = vmatprep.subr.bf16.mxu0 %v1451
    %1702 = vmatpush1.bf16.msra.mxu0 %v1450
    %1703 = vmatprep.subr.bf16.mxu0 %v1453
    %1704 = vmatpush1.bf16.msra.mxu0 %v1452
    %1705 = vmatprep.subr.bf16.mxu0 %v1455
    %1706 = vmatpush1.bf16.msra.mxu0 %v1454
    %1707 = vmatprep.subr.bf16.mxu0 %v1457
    %1708 = vmatpush1.bf16.msra.mxu0 %v1456
    %1709 = vmatprep.subr.bf16.mxu0 %v1459
    %1710 = vmatpush1.bf16.msra.mxu0 %v1458
    %1711 = vmatprep.subr.bf16.mxu0 %v1461
    %1712 = vmatpush1.bf16.msra.mxu0 %v1460
    %1713 = vmatprep.subr.bf16.mxu0 %v1463
    %1714 = vmatpush1.bf16.msra.mxu0 %v1462
    %1715 = vmatprep.subr.bf16.mxu0 %v1465
    %1716 = vmatpush1.bf16.msra.mxu0 %v1464
    %1717 = vmatprep.subr.bf16.mxu0 0
    %1718 = vmatpush1.bf16.msra.mxu0 0
    %1719 = vmatprep.subr.bf16.mxu0 0
    %1720 = vmatpush1.bf16.msra.mxu0 0
    %1721 = vmatprep.subr.bf16.mxu0 0
    %1722 = vmatpush1.bf16.msra.mxu0 0
    %1723 = vmatprep.subr.bf16.mxu0 0
    %1724 = vmatpush1.bf16.msra.mxu0 0
    %1725 = vmatprep.subr.bf16.mxu0 0
    %1726 = vmatpush1.bf16.msra.mxu0 0
    %1727 = vmatprep.subr.bf16.mxu0 0
    %1728 = vmatpush1.bf16.msra.mxu0 0
    %1729 = vmatprep.subr.bf16.mxu0 0
    %1730 = vmatpush1.bf16.msra.mxu0 0
    %1731 = vmatprep.subr.bf16.mxu0 0
    %1732 = vmatpush1.bf16.msra.mxu0 0
    %1733 = vmatprep.mubr.bf16.mxu0 0
    %1734 = vmatmul.mubr.bf16.gmra.mrb[0].mxu0 %v1010
    %v1735 = vpop.f32.mrb[0].mxu0
    %v1736 = vadd.f32 %v1695, %v1735
    %v1737 = vpop.f32.mrb[0].mxu0
    %v1738 = vadd.f32 %v1697, %v1737
    %v1739 = vpop.f32.mrb[0].mxu0
    %v1740 = vpop.f32.mrb[0].mxu0
    %1741 = vdwg.mxu0
    %v1742 = vmax.f32 %v1736, 0.0
    %v1743 = vmax.f32 %v1738, 0.0
    %v1744 = vpack.c.bf16 %v1742, %v1742
    %v1745 = vpack.c.bf16 %v1743, %v1743
    %v1746 = vld [vmem:[%s7] sm:$0xf]
    %v1747 = vld [vmem:[%s7 + $0x4] sm:$0xf]
    %v1748 = vld [vmem:[%s7 + $0x8] sm:$0xf]
    %v1749 = vld [vmem:[%s7 + $0xc] sm:$0xf]
    %v1750 = vld [vmem:[%s7 + $0x10] sm:$0xf]
    %v1751 = vld [vmem:[%s7 + $0x14] sm:$0xf]
    %v1752 = vld [vmem:[%s7 + $0x18] sm:$0xf]
    %v1753 = vld [vmem:[%s7 + $0x1c] sm:$0xf]
    %v1754 = vld [vmem:[%s7 + $0x20] sm:$0xf]
    %v1755 = vld [vmem:[%s7 + $0x24] sm:$0xf]
    %v1756 = vld [vmem:[%s7 + $0x28] sm:$0xf]
    %v1757 = vld [vmem:[%s7 + $0x2c] sm:$0xf]
    %v1758 = vld [vmem:[%s7 + $0x30] sm:$0xf]
    %v1759 = vld [vmem:[%s7 + $0x34] sm:$0xf]
    %v1760 = vld [vmem:[%s7 + $0x38] sm:$0xf]
    %v1761 = vld [vmem:[%s7 + $0x3c] sm:$0xf]
    %v1762 = vld [vmem:[%s7 + $0x40] sm:$0xf]
    %v1763 = vld [vmem:[%s7 + $0x44] sm:$0xf]
    %v1764 = vld [vmem:[%s7 + $0x48] sm:$0xf]
    %v1765 = vld [vmem:[%s7 + $0x4c] sm:$0xf]
    %v1766 = vld [vmem:[%s7 + $0x50] sm:$0xf]
    %v1767 = vld [vmem:[%s7 + $0x54] sm:$0xf]
    %v1768 = vld [vmem:[%s7 + $0x58] sm:$0xf]
    %v1769 = vld [vmem:[%s7 + $0x5c] sm:$0xf]
    %v1770 = vld [vmem:[%s7 + $0x60] sm:$0xf]
    %v1771 = vld [vmem:[%s7 + $0x64] sm:$0xf]
    %v1772 = vld [vmem:[%s7 + $0x68] sm:$0xf]
    %v1773 = vld [vmem:[%s7 + $0x6c] sm:$0xf]
    %v1774 = vld [vmem:[%s7 + $0x70] sm:$0xf]
    %v1775 = vld [vmem:[%s7 + $0x74] sm:$0xf]
    %v1776 = vld [vmem:[%s7 + $0x78] sm:$0xf]
    %v1777 = vld [vmem:[%s7 + $0x7c] sm:$0xf]
    %v1778 = vld [vmem:[%s8] sm:$0x1]
    %v1780 = vlaneseq
    %v1781 = vshrl.u32 %v1780, 7
    %v1782 = vsub.s32 0, %v1781
    %v1783 = vrot.slane %v1778, %v1782
    %v1817 = vunpack.c.l.b16 %v1746
    %v1818 = vunpack.c.l.b16 %v1747
    %v1819 = vunpack.c.l.b16 %v1748
    %v1820 = vunpack.c.l.b16 %v1749
    %v1821 = vunpack.c.l.b16 %v1750
    %v1822 = vunpack.c.l.b16 %v1751
    %v1823 = vunpack.c.l.b16 %v1752
    %v1824 = vunpack.c.l.b16 %v1753
    %v1825 = vunpack.c.l.b16 %v1754
    %v1826 = vunpack.c.l.b16 %v1755
    %v1827 = vunpack.c.l.b16 %v1756
    %v1828 = vunpack.c.l.b16 %v1757
    %v1829 = vunpack.c.l.b16 %v1758
    %v1830 = vunpack.c.l.b16 %v1759
    %v1831 = vunpack.c.l.b16 %v1760
    %v1832 = vunpack.c.l.b16 %v1761
    %v1833 = vunpack.c.l.b16 %v1762
    %v1834 = vunpack.c.l.b16 %v1763
    %v1835 = vunpack.c.l.b16 %v1764
    %v1836 = vunpack.c.l.b16 %v1765
    %v1837 = vunpack.c.l.b16 %v1766
    %v1838 = vunpack.c.l.b16 %v1767
    %v1839 = vunpack.c.l.b16 %v1768
    %v1840 = vunpack.c.l.b16 %v1769
    %v1841 = vunpack.c.l.b16 %v1770
    %v1842 = vunpack.c.l.b16 %v1771
    %v1843 = vunpack.c.l.b16 %v1772
    %v1844 = vunpack.c.l.b16 %v1773
    %v1845 = vunpack.c.l.b16 %v1774
    %v1846 = vunpack.c.l.b16 %v1775
    %v1847 = vunpack.c.l.b16 %v1776
    %v1848 = vunpack.c.l.b16 %v1777
    %v1849 = vpack.c.b16 %v1818, %v1817
    %v1850 = vpack.c.b16 %v1820, %v1819
    %v1851 = vpack.c.b16 %v1822, %v1821
    %v1852 = vpack.c.b16 %v1824, %v1823
    %v1853 = vpack.c.b16 %v1826, %v1825
    %v1854 = vpack.c.b16 %v1828, %v1827
    %v1855 = vpack.c.b16 %v1830, %v1829
    %v1856 = vpack.c.b16 %v1832, %v1831
    %v1857 = vpack.c.b16 %v1834, %v1833
    %v1858 = vpack.c.b16 %v1836, %v1835
    %v1859 = vpack.c.b16 %v1838, %v1837
    %v1860 = vpack.c.b16 %v1840, %v1839
    %v1861 = vpack.c.b16 %v1842, %v1841
    %v1862 = vpack.c.b16 %v1844, %v1843
    %v1863 = vpack.c.b16 %v1846, %v1845
    %v1864 = vpack.c.b16 %v1848, %v1847
    %1881 = vmatprep.subr.bf16.mxu0 0
    %1882 = vmatpush1.bf16.msra.mxu0 %v1849
    %1883 = vmatprep.subr.bf16.mxu0 0
    %1884 = vmatpush1.bf16.msra.mxu0 %v1850
    %1885 = vmatprep.subr.bf16.mxu0 0
    %1886 = vmatpush1.bf16.msra.mxu0 %v1851
    %1887 = vmatprep.subr.bf16.mxu0 0
    %1888 = vmatpush1.bf16.msra.mxu0 %v1852
    %1889 = vmatprep.subr.bf16.mxu0 0
    %1890 = vmatpush1.bf16.msra.mxu0 %v1853
    %1891 = vmatprep.subr.bf16.mxu0 0
    %1892 = vmatpush1.bf16.msra.mxu0 %v1854
    %1893 = vmatprep.subr.bf16.mxu0 0
    %1894 = vmatpush1.bf16.msra.mxu0 %v1855
    %1895 = vmatprep.subr.bf16.mxu0 0
    %1896 = vmatpush1.bf16.msra.mxu0 %v1856
    %1897 = vmatprep.subr.bf16.mxu0 0
    %1898 = vmatpush1.bf16.msra.mxu0 %v1857
    %1899 = vmatprep.subr.bf16.mxu0 0
    %1900 = vmatpush1.bf16.msra.mxu0 %v1858
    %1901 = vmatprep.subr.bf16.mxu0 0
    %1902 = vmatpush1.bf16.msra.mxu0 %v1859
    %1903 = vmatprep.subr.bf16.mxu0 0
    %1904 = vmatpush1.bf16.msra.mxu0 %v1860
    %1905 = vmatprep.subr.bf16.mxu0 0
    %1906 = vmatpush1.bf16.msra.mxu0 %v1861
    %1907 = vmatprep.subr.bf16.mxu0 0
    %1908 = vmatpush1.bf16.msra.mxu0 %v1862
    %1909 = vmatprep.subr.bf16.mxu0 0
    %1910 = vmatpush1.bf16.msra.mxu0 %v1863
    %1911 = vmatprep.subr.bf16.mxu0 0
    %1912 = vmatpush1.bf16.msra.mxu0 %v1864
    %1913 = vmatprep.mubr.bf16.mxu0 %v1745
    %1914 = vmatmul.mubr.bf16.gmra.mrb[0].mxu0 %v1744
    %v1915 = vpop.f32.mrb[0].mxu0
    %v1916 = vadd.f32 %v1783, %v1915
    %v1917 = vpop.f32.mrb[0].mxu0
    %v1918 = vpop.f32.mrb[0].mxu0
    %v1919 = vpop.f32.mrb[0].mxu0
    %1920 = vdwg.mxu0
    %v1921 = vmax.f32 %v1916, 0.0
    %v1922 = vpack.c.bf16 %v1921, %v1921
    %v1923 = vld [vmem:[%s9] sm:$0xf]
    %v1924 = vld [vmem:[%s9 + $0x4] sm:$0xf]
    %v1925 = vld [vmem:[%s9 + $0x8] sm:$0xf]
    %v1926 = vld [vmem:[%s9 + $0xc] sm:$0xf]
    %v1927 = vld [vmem:[%s9 + $0x10] sm:$0xf]
    %v1928 = vld [vmem:[%s9 + $0x14] sm:$0xf]
    %v1929 = vld [vmem:[%s9 + $0x18] sm:$0xf]
    %v1930 = vld [vmem:[%s9 + $0x1c] sm:$0xf]
    %v1931 = vld [vmem:[%s9 + $0x20] sm:$0xf]
    %v1932 = vld [vmem:[%s9 + $0x24] sm:$0xf]
    %v1933 = vld [vmem:[%s9 + $0x28] sm:$0xf]
    %v1934 = vld [vmem:[%s9 + $0x2c] sm:$0xf]
    %v1935 = vld [vmem:[%s9 + $0x30] sm:$0xf]
    %v1936 = vld [vmem:[%s9 + $0x34] sm:$0xf]
    %v1937 = vld [vmem:[%s9 + $0x38] sm:$0xf]
    %v1938 = vld [vmem:[%s9 + $0x3c] sm:$0xf]
    %v1939 = vld [vmem:[%s10] sm:$0x1]
    %v1941 = vlaneseq
    %v1942 = vshrl.u32 %v1941, 7
    %v1943 = vsub.s32 0, %v1942
    %v1944 = vrot.slane %v1939, %v1943
    %v1962 = vunpack.c.l.b16 %v1923
    %v1963 = vunpack.c.l.b16 %v1924
    %v1964 = vunpack.c.l.b16 %v1925
    %v1965 = vunpack.c.l.b16 %v1926
    %v1966 = vunpack.c.l.b16 %v1927
    %v1967 = vunpack.c.l.b16 %v1928
    %v1968 = vunpack.c.l.b16 %v1929
    %v1969 = vunpack.c.l.b16 %v1930
    %v1970 = vunpack.c.l.b16 %v1931
    %v1971 = vunpack.c.l.b16 %v1932
    %v1972 = vunpack.c.l.b16 %v1933
    %v1973 = vunpack.c.l.b16 %v1934
    %v1974 = vunpack.c.l.b16 %v1935
    %v1975 = vunpack.c.l.b16 %v1936
    %v1976 = vunpack.c.l.b16 %v1937
    %v1977 = vunpack.c.l.b16 %v1938
    %v1978 = vpack.c.b16 %v1963, %v1962
    %v1979 = vpack.c.b16 %v1965, %v1964
    %v1980 = vpack.c.b16 %v1967, %v1966
    %v1981 = vpack.c.b16 %v1969, %v1968
    %v1982 = vpack.c.b16 %v1971, %v1970
    %v1983 = vpack.c.b16 %v1973, %v1972
    %v1984 = vpack.c.b16 %v1975, %v1974
    %v1985 = vpack.c.b16 %v1977, %v1976
    %1994 = vmatprep.subr.bf16.mxu0 0
    %1995 = vmatpush1.bf16.msra.mxu0 %v1978
    %1996 = vmatprep.subr.bf16.mxu0 0
    %1997 = vmatpush1.bf16.msra.mxu0 %v1979
    %1998 = vmatprep.subr.bf16.mxu0 0
    %1999 = vmatpush1.bf16.msra.mxu0 %v1980
    %2000 = vmatprep.subr.bf16.mxu0 0
    %2001 = vmatpush1.bf16.msra.mxu0 %v1981
    %2002 = vmatprep.subr.bf16.mxu0 0
    %2003 = vmatpush1.bf16.msra.mxu0 %v1982
    %2004 = vmatprep.subr.bf16.mxu0 0
    %2005 = vmatpush1.bf16.msra.mxu0 %v1983
    %2006 = vmatprep.subr.bf16.mxu0 0
    %2007 = vmatpush1.bf16.msra.mxu0 %v1984
    %2008 = vmatprep.subr.bf16.mxu0 0
    %2009 = vmatpush1.bf16.msra.mxu0 %v1985
    %2010 = vmatprep.subr.bf16.mxu0 0
    %2011 = vmatpush1.bf16.msra.mxu0 0
    %2012 = vmatprep.subr.bf16.mxu0 0
    %2013 = vmatpush1.bf16.msra.mxu0 0
    %2014 = vmatprep.subr.bf16.mxu0 0
    %2015 = vmatpush1.bf16.msra.mxu0 0
    %2016 = vmatprep.subr.bf16.mxu0 0
    %2017 = vmatpush1.bf16.msra.mxu0 0
    %2018 = vmatprep.subr.bf16.mxu0 0
    %2019 = vmatpush1.bf16.msra.mxu0 0
    %2020 = vmatprep.subr.bf16.mxu0 0
    %2021 = vmatpush1.bf16.msra.mxu0 0
    %2022 = vmatprep.subr.bf16.mxu0 0
    %2023 = vmatpush1.bf16.msra.mxu0 0
    %2024 = vmatprep.subr.bf16.mxu0 0
    %2025 = vmatpush1.bf16.msra.mxu0 0
    %2026 = vmatprep.mubr.bf16.mxu0 0
    %2027 = vmatmul.mubr.bf16.gmra.mrb[0].mxu0 %v1922
    %v2028 = vpop.f32.mrb[0].mxu0
    %v2029 = vadd.f32 %v1944, %v2028
    %v2030 = vpop.f32.mrb[0].mxu0
    %v2031 = vpop.f32.mrb[0].mxu0
    %v2032 = vpop.f32.mrb[0].mxu0
    %2033 = vdwg.mxu0
    %v2034 = vld [vmem:[%s0 + $0x1c] sm:$0xf]
    %v2035 = vunpack.c.l.bf16 %v2034
    %v2036 = vmul.f32 %v2029, %v2035
    %v2037 = vsub.f32 1.0, %v2035
    %v2038 = vmul.f32 %v2037, -3.4028235e+38
    %v2039 = vadd.f32 %v2036, %v2038
    %vm2040 = vcmask 523264
    %2041 = vst.msk [vmem:[%s11] sm:$0xff] %vm2040, %v2039
    // Predicated region
    $region54: #{model_forward.1} parent=1 // pred_check
      _
    $region55: #{model_forward.1} parent=1 // pred_check_branch
      %2043 = sbr.rel (0) target = $region57
    $region56: #{model_forward.1} parent=1 // pred_region
      _
    $region57: #{model_forward.1} parent=1 // pred_fallthru
      _
    // Predicated region
    $region58: #{model_forward.1} parent=1 // pred_check
      _
    $region59: #{model_forward.1} parent=1 // pred_check_branch
      %2045 = sbr.rel (0) target = $region61
    $region60: #{model_forward.1} parent=1 // pred_region
      _
    $region61: #{model_forward.1} parent=1 // pred_fallthru
      _
    %2046 = vsyncpa [#allocation4], 1
    %2047 = vsyncpa [#allocation6], 1

</llo_original>
